<compile_context>
chip_gen: v7x
topology: tpu7x:2x2x1
jax: 0.10.0
libtpu: 0.0.40
codegen_flags: <defaults>
</compile_context>

<pallas_src>
import functools

import jax
import jax.numpy as jnp
import numpy as np
from jax.experimental import pallas as pl
from jax.experimental.pallas import tpu as pltpu

NO = 5 + 32            # box(4) + conf(1) + mask(32) channels per anchor
NKPT = 17              # keypoints (keynum = (16+1)*3)
KEYNUM = NKPT * 3      # 51 keypoint channels per anchor


# ----------------------------- Pallas kernel --------------------------------

def _fused_kernel(anch_ref, p_ref, k_ref, po_ref, ko_ref, *,
                  stride, W, T, A, yolovfive, training):
    # anch_ref: (A, 2) f32 in SMEM          (anchor w, h per anchor)
    # p_ref / po_ref: (1, A, NO, T)         prediction head block
    # k_ref / ko_ref: (1, A, KEYNUM, T)     keypoint head block

    # Spatial coordinates of this HW chunk, generated in-kernel (no aux DMA).
    # Float math avoids vector integer div/mod; exact for any realistic map.
    base = pl.program_id(1) * T
    lane = jax.lax.broadcasted_iota(jnp.int32, (1, T), 1) + base
    lane_f = lane.astype(jnp.float32)
    yg = jnp.floor((lane_f + 0.5) * (1.0 / float(W)))       # (1, T) row index
    xg = lane_f - yg * float(W)                             # (1, T) col index

    # ---------------- prediction head ----------------
    # Rows 8..NO-1 (mask logits) are a pure passthrough -> one aligned bulk
    # copy, then only the first 8 sublanes (xy, wh, conf, 3 mask rows) are
    # recomputed: sigmoid/exp run on 8 rows instead of 37.
    po_ref[...] = p_ref[...]

    rows8 = jax.lax.broadcasted_iota(jnp.int32, (8, 1), 0)                 # (8, 1)
    grid8 = jnp.where(rows8 == 0, xg, jnp.where(rows8 == 1, yg, 0.0))      # (8, T)

    for a in range(A):
        aw = anch_ref[a, 0]
        ah = anch_ref[a, 1]
        anch8 = jnp.where(rows8 == 2, aw, jnp.where(rows8 == 3, ah, 0.0))  # (8, 1)
        top = p_ref[0, a, 0:8, :].astype(jnp.float32)                      # (8, T)
        sig = jax.nn.sigmoid(top)
        if yolovfive:
            xy_t = (sig * 2.0 - 0.6 + 0.1 + grid8) * stride
            wh_t = (sig * 2.0) ** 2 * anch8
        else:
            xy_t = (sig + grid8) * stride
            wh_t = jnp.exp(top) * anch8
        conf_t = top if training else sig
        top_out = jnp.where(rows8 < 2, xy_t,
                  jnp.where(rows8 < 4, wh_t,
                  jnp.where(rows8 == 4, conf_t, top)))
        po_ref[0, a, 0:8, :] = top_out.astype(po_ref.dtype)

    # ---------------- keypoint head ----------------
    # Row selectors (x / y / conf interleaved with period 3), built in-kernel.
    kr = jax.lax.broadcasted_iota(jnp.int32, (KEYNUM, 1), 0).astype(jnp.float32)
    kq = jnp.floor((kr + 0.5) * (1.0 / 3.0))
    kr3 = kr - 3.0 * kq                                                    # (KEYNUM, 1)
    gridk = jnp.where(kr3 < 0.5, xg, jnp.where(kr3 < 1.5, yg, 0.0))        # (KEYNUM, T)
    is_kconf = kr3 > 1.5                                                   # (KEYNUM, 1)

    k = k_ref[0].astype(jnp.float32)                                       # (A, KEYNUM, T)
    kxy_t = (k * 2.0 - 0.6 + 0.1 + gridk) * stride                         # no sigmoid (matches torch)
    kconf_t = k if training else jax.nn.sigmoid(k)
    # TODO(synk): restricting the sigmoid to the 17 conf rows needs a stride-3
    # sublane gather/scatter; full-row sigmoid stays well under the DMA roofline.
    ko_ref[0] = jnp.where(is_kconf, kconf_t, kxy_t).astype(ko_ref.dtype)


# ------------------------------- wrapper ------------------------------------

def _pick_hw_chunk(hw):
    """Largest HW lane tile (multiple of 128 dividing HW, <=2048) or full HW."""
    if hw <= 2048:
        return hw
    for t in range(2048, 127, -128):
        if hw % t == 0:
            return t
    return hw


def yolo_seg_keypoint(pred_nchw, kpt_nchw, anchors, imgsize, num_anchors,
                      yolovfive=False, training=False):
    B, _, H, W = pred_nchw.shape
    A = num_anchors
    HW = H * W
    stride = imgsize // H                 # static python int
    assert H == W, "grid construction in the torch module assumes square maps"
    dtype = pred_nchw.dtype

    p4 = pred_nchw.reshape(B, A, NO, HW)
    k4 = kpt_nchw.reshape(B, A, KEYNUM, HW)
    anch = anchors.reshape(A, 2).astype(jnp.float32)

    T = _pick_hw_chunk(HW)
    nchunks = HW // T

    kernel = functools.partial(
        _fused_kernel, stride=float(stride), W=W, T=T, A=A,
        yolovfive=yolovfive, training=training)

    pred_out4, kpt_out4 = pl.pallas_call(
        kernel,
        out_shape=(jax.ShapeDtypeStruct((B, A, NO, HW), dtype),
                   jax.ShapeDtypeStruct((B, A, KEYNUM, HW), dtype)),
        grid=(B, nchunks),
        in_specs=[
            pl.BlockSpec(memory_space=pltpu.MemorySpace.SMEM),        # anchors (A, 2)
            pl.BlockSpec((1, A, NO, T), lambda b, c: (b, 0, 0, c)),
            pl.BlockSpec((1, A, KEYNUM, T), lambda b, c: (b, 0, 0, c)),
        ],
        out_specs=(
            pl.BlockSpec((1, A, NO, T), lambda b, c: (b, 0, 0, c)),
            pl.BlockSpec((1, A, KEYNUM, T), lambda b, c: (b, 0, 0, c)),
        ),
        compiler_params=pltpu.CompilerParams(
            dimension_semantics=("parallel", "parallel"),
            vmem_limit_bytes=48 * 1024 * 1024),
    )(anch, p4, k4)

    # Channels-last permute + final shapes required by the torch contract.
    # TODO(synk): the (B,A,C,HW)->(B,A,HW,C) permute is left to XLA; with a
    # 37/51-wide minor dim an in-kernel transpose is lowering-fragile, so we
    # trade one extra (dtype-preserving) HBM pass for robustness.
    prediction = jnp.transpose(pred_out4, (0, 1, 3, 2)).reshape(B, A * HW, NO)
    keypoint = jnp.transpose(kpt_out4, (0, 1, 3, 2)).reshape(B, A * HW, NKPT, 3)

    # Per-cell anchor boxes in xyxy (the torch module caches this per feature
    # map height); one-time setup, not the per-prediction hot path -> JAX glue.
    xg = jnp.broadcast_to(jnp.arange(W, dtype=jnp.float32)[None, :], (H, W)).reshape(HW)
    yg = jnp.broadcast_to(jnp.arange(H, dtype=jnp.float32)[:, None], (H, W)).reshape(HW)
    aw, ah = anch[:, 0:1], anch[:, 1:2]                     # (A, 1)
    cx = xg[None, :] * float(stride)                        # (1, HW) -> (A, HW)
    cy = yg[None, :] * float(stride)
    result = jnp.stack([cx - aw / 2.0, cy - ah / 2.0,
                        cx + aw / 2.0, cy + ah / 2.0], axis=-1).reshape(A * HW, 4)

    return prediction, result, keypoint


# ------------------------ pure-JAX reference (torch semantics) ---------------

def reference(pred_nchw, kpt_nchw, anchors, imgsize, A, yolovfive=False, training=False):
    B, _, H, W = pred_nchw.shape
    stride = imgsize // H
    p = pred_nchw.reshape(B, A, NO, H, W).transpose(0, 1, 3, 4, 2)
    k = kpt_nchw.reshape(B, A, KEYNUM, H, W).transpose(0, 1, 3, 4, 2)
    yv, xv = jnp.meshgrid(jnp.arange(H), jnp.arange(W), indexing="ij")
    grid = jnp.stack([xv, yv], -1).astype(jnp.float32)[None, None]     # (1,1,H,W,2)
    kptgrid = grid[:, :, :, :, None, :]
    xy, wh, conf, mask = p[..., 0:2], p[..., 2:4], p[..., 4:5], p[..., 5:]
    kpt = k.reshape(B, A, H, W, NKPT, 3)
    kxy, kconf = kpt[..., :2], kpt[..., 2:]
    kxy = (kxy * 2 - 0.6 + 0.1 + kptgrid) * stride
    if yolovfive:
        xy = (jax.nn.sigmoid(xy) * 2 - 0.6 + 0.1 + grid) * stride
        wh = (jax.nn.sigmoid(wh) * 2) ** 2 * anchors
    else:
        xy = (jax.nn.sigmoid(xy) + grid) * stride
        wh = jnp.exp(wh) * anchors
    if not training:
        conf = jax.nn.sigmoid(conf)
        kconf = jax.nn.sigmoid(kconf)
    pred_out = jnp.concatenate([xy, wh, conf, mask], -1).reshape(B, -1, NO)
    kpt_out = jnp.concatenate([kxy, kconf], -1).reshape(B, -1, NKPT, 3)
    grid__ = jnp.repeat(grid, A, axis=1) * stride
    wh_b = jnp.ones_like(grid__) * anchors
    res = jnp.concatenate([grid__, wh_b], -1).reshape(-1, 4)
    res = jnp.concatenate([res[:, 0:2] - res[:, 2:] / 2.0,
                           res[:, 0:2] + res[:, 2:] / 2.0], -1)
    return pred_out, res, kpt_out


if __name__ == "__main__":
    key = jax.random.PRNGKey(0)
    B, A, H, W = 2, 3, 16, 16
    imgsize = 128
    k1, k2, k3 = jax.random.split(key, 3)
    pred_nchw = jax.random.normal(k1, (B, A * NO, H, W), jnp.float32)
    kpt_nchw = jax.random.normal(k2, (B, A * KEYNUM, H, W), jnp.float32)
    # anchors (shape broadcastable to (B, A, H, W, 2), as in the torch call site)
    anchors = jax.random.uniform(k3, (1, A, 1, 1, 2), jnp.float32, 8.0, 64.0)

    fwd = jax.jit(yolo_seg_keypoint, static_argnums=(3, 4, 5, 6))
    pred, boxes, kpts = fwd(pred_nchw, kpt_nchw, anchors, imgsize, A, False, False)
    jax.block_until_ready((pred, boxes, kpts))

    rp, rb, rk = reference(pred_nchw, kpt_nchw, anchors, imgsize, A,
                           yolovfive=False, training=False)
    assert pred.shape == (B, A * H * W, NO)
    assert boxes.shape == (A * H * W, 4)
    assert kpts.shape == (B, A * H * W, NKPT, 3)
    np.testing.assert_allclose(np.asarray(pred), np.asarray(rp), rtol=1e-5, atol=1e-5)
    np.testing.assert_allclose(np.asarray(boxes), np.asarray(rb), rtol=1e-5, atol=1e-5)
    np.testing.assert_allclose(np.asarray(kpts), np.asarray(rk), rtol=1e-5, atol=1e-5)
    print("KERNEL_OK")
</pallas_src>

<mosaic_0001>
module attributes {stable_mosaic.version = 11 : i64} {
  func.func @_fused_kernel(%arg0: i32, %arg1: i32, %arg2: memref<3x2xf32, #tpu.memory_space<smem>>, %arg3: memref<1x3x37x256xf32, #tpu.memory_space<vmem>>, %arg4: memref<1x3x51x256xf32, #tpu.memory_space<vmem>>, %arg5: memref<1x3x37x256xf32, #tpu.memory_space<vmem>>, %arg6: memref<1x3x51x256xf32, #tpu.memory_space<vmem>>) attributes {dimension_semantics = [#tpu.dimension_semantics<parallel>, #tpu.dimension_semantics<parallel>], iteration_bounds = array<i64: 2, 1>, scalar_prefetch = 0 : i64, scratch_operands = 0 : i64, tpu.core_type = #tpu.core_type<tc>, window_params = [{transform_indices = @transform_0, window_bounds = array<i64: 3, 2>}, {transform_indices = @transform_1, window_bounds = array<i64: 1, 3, 37, 256>}, {transform_indices = @transform_2, window_bounds = array<i64: 1, 3, 51, 256>}, {transform_indices = @transform_3, window_bounds = array<i64: 1, 3, 37, 256>}, {transform_indices = @transform_4, window_bounds = array<i64: 1, 3, 51, 256>}]} {
    %c256_i32 = arith.constant 256 : i32
    %0 = arith.muli %arg1, %c256_i32 : i32
    %1 = tpu.iota {dimensions = array<i32: 1>} : vector<1x256xi32>
    %2 = vector.broadcast %0 : i32 to vector<1x256xi32>
    %3 = arith.addi %1, %2 : vector<1x256xi32>
    %4 = arith.sitofp %3 : vector<1x256xi32> to vector<1x256xf32>
    %cst = arith.constant 5.000000e-01 : f32
    %5 = vector.broadcast %cst : f32 to vector<1x256xf32>
    %6 = arith.addf %4, %5 : vector<1x256xf32>
    %cst_0 = arith.constant 6.250000e-02 : f32
    %7 = vector.broadcast %cst_0 : f32 to vector<1x256xf32>
    %8 = arith.mulf %6, %7 : vector<1x256xf32>
    %9 = math.floor %8 : vector<1x256xf32>
    %cst_1 = arith.constant 1.600000e+01 : f32
    %10 = vector.broadcast %cst_1 : f32 to vector<1x256xf32>
    %11 = arith.mulf %9, %10 : vector<1x256xf32>
    %12 = arith.subf %4, %11 : vector<1x256xf32>
    %c0 = arith.constant 0 : index
    %c0_2 = arith.constant 0 : index
    %c0_3 = arith.constant 0 : index
    %c0_4 = arith.constant 0 : index
    %13 = vector.load %arg3[%c0, %c0_2, %c0_3, %c0_4] : memref<1x3x37x256xf32, #tpu.memory_space<vmem>>, vector<1x3x37x256xf32>
    %c0_5 = arith.constant 0 : index
    %c0_6 = arith.constant 0 : index
    %c0_7 = arith.constant 0 : index
    %c0_8 = arith.constant 0 : index
    %14 = vector.load %arg5[%c0_5, %c0_6, %c0_7, %c0_8] : memref<1x3x37x256xf32, #tpu.memory_space<vmem>>, vector<1x3x37x256xf32>
    tpu.vector_store %arg5[%c0_5, %c0_6, %c0_7, %c0_8], %13 {strides = array<i32>} : memref<1x3x37x256xf32, #tpu.memory_space<vmem>>, vector<1x3x37x256xf32>,
    %15 = tpu.iota {dimensions = array<i32: 0>} : vector<8x1xi32>
    %c0_i32 = arith.constant 0 : i32
    %16 = vector.broadcast %c0_i32 : i32 to vector<8x1xi32>
    %17 = arith.cmpi eq, %15, %16 : vector<8x1xi32>
    %c1_i32 = arith.constant 1 : i32
    %18 = vector.broadcast %c1_i32 : i32 to vector<8x1xi32>
    %19 = arith.cmpi eq, %15, %18 : vector<8x1xi32>
    %cst_9 = arith.constant 0.000000e+00 : f32
    %20 = vector.shape_cast %19 : vector<8x1xi1> to vector<8x1xi1>
    %21 = vector.broadcast %20 : vector<8x1xi1> to vector<8x256xi1>
    %22 = vector.shape_cast %9 : vector<1x256xf32> to vector<1x256xf32>
    %23 = vector.broadcast %22 : vector<1x256xf32> to vector<8x256xf32>
    %24 = vector.broadcast %cst_9 : f32 to vector<8x256xf32>
    %25 = arith.select %21, %23, %24 : vector<8x256xi1>, vector<8x256xf32>
    %26 = vector.shape_cast %17 : vector<8x1xi1> to vector<8x1xi1>
    %27 = vector.broadcast %26 : vector<8x1xi1> to vector<8x256xi1>
    %28 = vector.shape_cast %12 : vector<1x256xf32> to vector<1x256xf32>
    %29 = vector.broadcast %28 : vector<1x256xf32> to vector<8x256xf32>
    %30 = arith.select %27, %29, %25 : vector<8x256xi1>, vector<8x256xf32>
    %c0_10 = arith.constant 0 : index
    %c0_11 = arith.constant 0 : index
    %31 = memref.load %arg2[%c0_10, %c0_11] : memref<3x2xf32, #tpu.memory_space<smem>>
    %c0_12 = arith.constant 0 : index
    %c1 = arith.constant 1 : index
    %32 = memref.load %arg2[%c0_12, %c1] : memref<3x2xf32, #tpu.memory_space<smem>>
    %c2_i32 = arith.constant 2 : i32
    %33 = vector.broadcast %c2_i32 : i32 to vector<8x1xi32>
    %34 = arith.cmpi eq, %15, %33 : vector<8x1xi32>
    %c3_i32 = arith.constant 3 : i32
    %35 = vector.broadcast %c3_i32 : i32 to vector<8x1xi32>
    %36 = arith.cmpi eq, %15, %35 : vector<8x1xi32>
    %cst_13 = arith.constant 0.000000e+00 : f32
    %37 = vector.broadcast %32 : f32 to vector<8x1xf32>
    %38 = vector.broadcast %cst_13 : f32 to vector<8x1xf32>
    %39 = arith.select %36, %37, %38 : vector<8x1xi1>, vector<8x1xf32>
    %40 = vector.broadcast %31 : f32 to vector<8x1xf32>
    %41 = arith.select %34, %40, %39 : vector<8x1xi1>, vector<8x1xf32>
    %c0_14 = arith.constant 0 : index
    %c0_15 = arith.constant 0 : index
    %c0_16 = arith.constant 0 : index
    %c0_17 = arith.constant 0 : index
    %42 = vector.load %arg3[%c0_14, %c0_15, %c0_16, %c0_17] : memref<1x3x37x256xf32, #tpu.memory_space<vmem>>, vector<1x1x8x256xf32>
    %43 = vector.shape_cast %42 : vector<1x1x8x256xf32> to vector<8x256xf32>
    %44 = arith.negf %43 : vector<8x256xf32>
    %45 = math.exp %44 : vector<8x256xf32>
    %cst_18 = arith.constant 1.000000e+00 : f32
    %46 = vector.broadcast %cst_18 : f32 to vector<8x256xf32>
    %47 = arith.addf %46, %45 : vector<8x256xf32>
    %48 = arith.divf %46, %47 : vector<8x256xf32>
    %49 = arith.addf %48, %30 : vector<8x256xf32>
    %cst_19 = arith.constant 8.000000e+00 : f32
    %50 = vector.broadcast %cst_19 : f32 to vector<8x256xf32>
    %51 = arith.mulf %49, %50 : vector<8x256xf32>
    %52 = math.exp %43 : vector<8x256xf32>
    %53 = vector.broadcast %41 : vector<8x1xf32> to vector<8x256xf32>
    %54 = arith.mulf %52, %53 : vector<8x256xf32>
    %c2_i32_20 = arith.constant 2 : i32
    %55 = vector.broadcast %c2_i32_20 : i32 to vector<8x1xi32>
    %56 = arith.cmpi slt, %15, %55 : vector<8x1xi32>
    %c4_i32 = arith.constant 4 : i32
    %57 = vector.broadcast %c4_i32 : i32 to vector<8x1xi32>
    %58 = arith.cmpi slt, %15, %57 : vector<8x1xi32>
    %c4_i32_21 = arith.constant 4 : i32
    %59 = vector.broadcast %c4_i32_21 : i32 to vector<8x1xi32>
    %60 = arith.cmpi eq, %15, %59 : vector<8x1xi32>
    %61 = vector.shape_cast %60 : vector<8x1xi1> to vector<8x1xi1>
    %62 = vector.broadcast %61 : vector<8x1xi1> to vector<8x256xi1>
    %63 = arith.select %62, %48, %43 : vector<8x256xi1>, vector<8x256xf32>
    %64 = vector.shape_cast %58 : vector<8x1xi1> to vector<8x1xi1>
    %65 = vector.broadcast %64 : vector<8x1xi1> to vector<8x256xi1>
    %66 = arith.select %65, %54, %63 : vector<8x256xi1>, vector<8x256xf32>
    %67 = vector.shape_cast %56 : vector<8x1xi1> to vector<8x1xi1>
    %68 = vector.broadcast %67 : vector<8x1xi1> to vector<8x256xi1>
    %69 = arith.select %68, %51, %66 : vector<8x256xi1>, vector<8x256xf32>
    %c0_22 = arith.constant 0 : index
    %c0_23 = arith.constant 0 : index
    %c0_24 = arith.constant 0 : index
    %c0_25 = arith.constant 0 : index
    %70 = vector.load %arg5[%c0_22, %c0_23, %c0_24, %c0_25] : memref<1x3x37x256xf32, #tpu.memory_space<vmem>>, vector<1x1x8x256xf32>
    %71 = vector.shape_cast %70 : vector<1x1x8x256xf32> to vector<8x256xf32>
    %72 = vector.shape_cast %69 : vector<8x256xf32> to vector<1x1x8x256xf32>
    tpu.vector_store %arg5[%c0_22, %c0_23, %c0_24, %c0_25], %72 {strides = array<i32>} : memref<1x3x37x256xf32, #tpu.memory_space<vmem>>, vector<1x1x8x256xf32>,
    %c1_26 = arith.constant 1 : index
    %c0_27 = arith.constant 0 : index
    %73 = memref.load %arg2[%c1_26, %c0_27] : memref<3x2xf32, #tpu.memory_space<smem>>
    %c1_28 = arith.constant 1 : index
    %c1_29 = arith.constant 1 : index
    %74 = memref.load %arg2[%c1_28, %c1_29] : memref<3x2xf32, #tpu.memory_space<smem>>
    %c2_i32_30 = arith.constant 2 : i32
    %75 = vector.broadcast %c2_i32_30 : i32 to vector<8x1xi32>
    %76 = arith.cmpi eq, %15, %75 : vector<8x1xi32>
    %c3_i32_31 = arith.constant 3 : i32
    %77 = vector.broadcast %c3_i32_31 : i32 to vector<8x1xi32>
    %78 = arith.cmpi eq, %15, %77 : vector<8x1xi32>
    %cst_32 = arith.constant 0.000000e+00 : f32
    %79 = vector.broadcast %74 : f32 to vector<8x1xf32>
    %80 = vector.broadcast %cst_32 : f32 to vector<8x1xf32>
    %81 = arith.select %78, %79, %80 : vector<8x1xi1>, vector<8x1xf32>
    %82 = vector.broadcast %73 : f32 to vector<8x1xf32>
    %83 = arith.select %76, %82, %81 : vector<8x1xi1>, vector<8x1xf32>
    %c0_33 = arith.constant 0 : index
    %c1_34 = arith.constant 1 : index
    %c0_35 = arith.constant 0 : index
    %c0_36 = arith.constant 0 : index
    %84 = vector.load %arg3[%c0_33, %c1_34, %c0_35, %c0_36] : memref<1x3x37x256xf32, #tpu.memory_space<vmem>>, vector<1x1x8x256xf32>
    %85 = vector.shape_cast %84 : vector<1x1x8x256xf32> to vector<8x256xf32>
    %86 = arith.negf %85 : vector<8x256xf32>
    %87 = math.exp %86 : vector<8x256xf32>
    %cst_37 = arith.constant 1.000000e+00 : f32
    %88 = vector.broadcast %cst_37 : f32 to vector<8x256xf32>
    %89 = arith.addf %88, %87 : vector<8x256xf32>
    %90 = arith.divf %88, %89 : vector<8x256xf32>
    %91 = arith.addf %90, %30 : vector<8x256xf32>
    %cst_38 = arith.constant 8.000000e+00 : f32
    %92 = vector.broadcast %cst_38 : f32 to vector<8x256xf32>
    %93 = arith.mulf %91, %92 : vector<8x256xf32>
    %94 = math.exp %85 : vector<8x256xf32>
    %95 = vector.broadcast %83 : vector<8x1xf32> to vector<8x256xf32>
    %96 = arith.mulf %94, %95 : vector<8x256xf32>
    %c2_i32_39 = arith.constant 2 : i32
    %97 = vector.broadcast %c2_i32_39 : i32 to vector<8x1xi32>
    %98 = arith.cmpi slt, %15, %97 : vector<8x1xi32>
    %c4_i32_40 = arith.constant 4 : i32
    %99 = vector.broadcast %c4_i32_40 : i32 to vector<8x1xi32>
    %100 = arith.cmpi slt, %15, %99 : vector<8x1xi32>
    %c4_i32_41 = arith.constant 4 : i32
    %101 = vector.broadcast %c4_i32_41 : i32 to vector<8x1xi32>
    %102 = arith.cmpi eq, %15, %101 : vector<8x1xi32>
    %103 = vector.shape_cast %102 : vector<8x1xi1> to vector<8x1xi1>
    %104 = vector.broadcast %103 : vector<8x1xi1> to vector<8x256xi1>
    %105 = arith.select %104, %90, %85 : vector<8x256xi1>, vector<8x256xf32>
    %106 = vector.shape_cast %100 : vector<8x1xi1> to vector<8x1xi1>
    %107 = vector.broadcast %106 : vector<8x1xi1> to vector<8x256xi1>
    %108 = arith.select %107, %96, %105 : vector<8x256xi1>, vector<8x256xf32>
    %109 = vector.shape_cast %98 : vector<8x1xi1> to vector<8x1xi1>
    %110 = vector.broadcast %109 : vector<8x1xi1> to vector<8x256xi1>
    %111 = arith.select %110, %93, %108 : vector<8x256xi1>, vector<8x256xf32>
    %c0_42 = arith.constant 0 : index
    %c1_43 = arith.constant 1 : index
    %c0_44 = arith.constant 0 : index
    %c0_45 = arith.constant 0 : index
    %112 = vector.load %arg5[%c0_42, %c1_43, %c0_44, %c0_45] : memref<1x3x37x256xf32, #tpu.memory_space<vmem>>, vector<1x1x8x256xf32>
    %113 = vector.shape_cast %112 : vector<1x1x8x256xf32> to vector<8x256xf32>
    %114 = vector.shape_cast %111 : vector<8x256xf32> to vector<1x1x8x256xf32>
    tpu.vector_store %arg5[%c0_42, %c1_43, %c0_44, %c0_45], %114 {strides = array<i32>} : memref<1x3x37x256xf32, #tpu.memory_space<vmem>>, vector<1x1x8x256xf32>,
    %c2 = arith.constant 2 : index
    %c0_46 = arith.constant 0 : index
    %115 = memref.load %arg2[%c2, %c0_46] : memref<3x2xf32, #tpu.memory_space<smem>>
    %c2_47 = arith.constant 2 : index
    %c1_48 = arith.constant 1 : index
    %116 = memref.load %arg2[%c2_47, %c1_48] : memref<3x2xf32, #tpu.memory_space<smem>>
    %c2_i32_49 = arith.constant 2 : i32
    %117 = vector.broadcast %c2_i32_49 : i32 to vector<8x1xi32>
    %118 = arith.cmpi eq, %15, %117 : vector<8x1xi32>
    %c3_i32_50 = arith.constant 3 : i32
    %119 = vector.broadcast %c3_i32_50 : i32 to vector<8x1xi32>
    %120 = arith.cmpi eq, %15, %119 : vector<8x1xi32>
    %cst_51 = arith.constant 0.000000e+00 : f32
    %121 = vector.broadcast %116 : f32 to vector<8x1xf32>
    %122 = vector.broadcast %cst_51 : f32 to vector<8x1xf32>
    %123 = arith.select %120, %121, %122 : vector<8x1xi1>, vector<8x1xf32>
    %124 = vector.broadcast %115 : f32 to vector<8x1xf32>
    %125 = arith.select %118, %124, %123 : vector<8x1xi1>, vector<8x1xf32>
    %c0_52 = arith.constant 0 : index
    %c2_53 = arith.constant 2 : index
    %c0_54 = arith.constant 0 : index
    %c0_55 = arith.constant 0 : index
    %126 = vector.load %arg3[%c0_52, %c2_53, %c0_54, %c0_55] : memref<1x3x37x256xf32, #tpu.memory_space<vmem>>, vector<1x1x8x256xf32>
    %127 = vector.shape_cast %126 : vector<1x1x8x256xf32> to vector<8x256xf32>
    %128 = arith.negf %127 : vector<8x256xf32>
    %129 = math.exp %128 : vector<8x256xf32>
    %cst_56 = arith.constant 1.000000e+00 : f32
    %130 = vector.broadcast %cst_56 : f32 to vector<8x256xf32>
    %131 = arith.addf %130, %129 : vector<8x256xf32>
    %132 = arith.divf %130, %131 : vector<8x256xf32>
    %133 = arith.addf %132, %30 : vector<8x256xf32>
    %cst_57 = arith.constant 8.000000e+00 : f32
    %134 = vector.broadcast %cst_57 : f32 to vector<8x256xf32>
    %135 = arith.mulf %133, %134 : vector<8x256xf32>
    %136 = math.exp %127 : vector<8x256xf32>
    %137 = vector.broadcast %125 : vector<8x1xf32> to vector<8x256xf32>
    %138 = arith.mulf %136, %137 : vector<8x256xf32>
    %c2_i32_58 = arith.constant 2 : i32
    %139 = vector.broadcast %c2_i32_58 : i32 to vector<8x1xi32>
    %140 = arith.cmpi slt, %15, %139 : vector<8x1xi32>
    %c4_i32_59 = arith.constant 4 : i32
    %141 = vector.broadcast %c4_i32_59 : i32 to vector<8x1xi32>
    %142 = arith.cmpi slt, %15, %141 : vector<8x1xi32>
    %c4_i32_60 = arith.constant 4 : i32
    %143 = vector.broadcast %c4_i32_60 : i32 to vector<8x1xi32>
    %144 = arith.cmpi eq, %15, %143 : vector<8x1xi32>
    %145 = vector.shape_cast %144 : vector<8x1xi1> to vector<8x1xi1>
    %146 = vector.broadcast %145 : vector<8x1xi1> to vector<8x256xi1>
    %147 = arith.select %146, %132, %127 : vector<8x256xi1>, vector<8x256xf32>
    %148 = vector.shape_cast %142 : vector<8x1xi1> to vector<8x1xi1>
    %149 = vector.broadcast %148 : vector<8x1xi1> to vector<8x256xi1>
    %150 = arith.select %149, %138, %147 : vector<8x256xi1>, vector<8x256xf32>
    %151 = vector.shape_cast %140 : vector<8x1xi1> to vector<8x1xi1>
    %152 = vector.broadcast %151 : vector<8x1xi1> to vector<8x256xi1>
    %153 = arith.select %152, %135, %150 : vector<8x256xi1>, vector<8x256xf32>
    %c0_61 = arith.constant 0 : index
    %c2_62 = arith.constant 2 : index
    %c0_63 = arith.constant 0 : index
    %c0_64 = arith.constant 0 : index
    %154 = vector.load %arg5[%c0_61, %c2_62, %c0_63, %c0_64] : memref<1x3x37x256xf32, #tpu.memory_space<vmem>>, vector<1x1x8x256xf32>
    %155 = vector.shape_cast %154 : vector<1x1x8x256xf32> to vector<8x256xf32>
    %156 = vector.shape_cast %153 : vector<8x256xf32> to vector<1x1x8x256xf32>
    tpu.vector_store %arg5[%c0_61, %c2_62, %c0_63, %c0_64], %156 {strides = array<i32>} : memref<1x3x37x256xf32, #tpu.memory_space<vmem>>, vector<1x1x8x256xf32>,
    %157 = tpu.iota {dimensions = array<i32: 0>} : vector<51x1xi32>
    %158 = arith.sitofp %157 : vector<51x1xi32> to vector<51x1xf32>
    %cst_65 = arith.constant 5.000000e-01 : f32
    %159 = vector.broadcast %cst_65 : f32 to vector<51x1xf32>
    %160 = arith.addf %158, %159 : vector<51x1xf32>
    %cst_66 = arith.constant 0.333333343 : f32
    %161 = vector.broadcast %cst_66 : f32 to vector<51x1xf32>
    %162 = arith.mulf %160, %161 : vector<51x1xf32>
    %163 = math.floor %162 : vector<51x1xf32>
    %cst_67 = arith.constant 3.000000e+00 : f32
    %164 = vector.broadcast %cst_67 : f32 to vector<51x1xf32>
    %165 = arith.mulf %164, %163 : vector<51x1xf32>
    %166 = arith.subf %158, %165 : vector<51x1xf32>
    %cst_68 = arith.constant 5.000000e-01 : f32
    %167 = vector.broadcast %cst_68 : f32 to vector<51x1xf32>
    %168 = arith.cmpf olt, %166, %167 : vector<51x1xf32>
    %cst_69 = arith.constant 1.500000e+00 : f32
    %169 = vector.broadcast %cst_69 : f32 to vector<51x1xf32>
    %170 = arith.cmpf olt, %166, %169 : vector<51x1xf32>
    %cst_70 = arith.constant 0.000000e+00 : f32
    %171 = vector.shape_cast %170 : vector<51x1xi1> to vector<51x1xi1>
    %172 = vector.broadcast %171 : vector<51x1xi1> to vector<51x256xi1>
    %173 = vector.shape_cast %9 : vector<1x256xf32> to vector<1x256xf32>
    %174 = vector.broadcast %173 : vector<1x256xf32> to vector<51x256xf32>
    %175 = vector.broadcast %cst_70 : f32 to vector<51x256xf32>
    %176 = arith.select %172, %174, %175 : vector<51x256xi1>, vector<51x256xf32>
    %177 = vector.shape_cast %168 : vector<51x1xi1> to vector<51x1xi1>
    %178 = vector.broadcast %177 : vector<51x1xi1> to vector<51x256xi1>
    %179 = vector.shape_cast %12 : vector<1x256xf32> to vector<1x256xf32>
    %180 = vector.broadcast %179 : vector<1x256xf32> to vector<51x256xf32>
    %181 = arith.select %178, %180, %176 : vector<51x256xi1>, vector<51x256xf32>
    %cst_71 = arith.constant 1.500000e+00 : f32
    %182 = vector.broadcast %cst_71 : f32 to vector<51x1xf32>
    %183 = arith.cmpf ogt, %166, %182 : vector<51x1xf32>
    %c0_72 = arith.constant 0 : index
    %c0_73 = arith.constant 0 : index
    %c0_74 = arith.constant 0 : index
    %c0_75 = arith.constant 0 : index
    %184 = vector.load %arg4[%c0_72, %c0_73, %c0_74, %c0_75] : memref<1x3x51x256xf32, #tpu.memory_space<vmem>>, vector<1x3x51x256xf32>
    %185 = vector.shape_cast %184 : vector<1x3x51x256xf32> to vector<3x51x256xf32>
    %cst_76 = arith.constant 2.000000e+00 : f32
    %186 = vector.broadcast %cst_76 : f32 to vector<3x51x256xf32>
    %187 = arith.mulf %185, %186 : vector<3x51x256xf32>
    %cst_77 = arith.constant 6.000000e-01 : f32
    %188 = vector.broadcast %cst_77 : f32 to vector<3x51x256xf32>
    %189 = arith.subf %187, %188 : vector<3x51x256xf32>
    %cst_78 = arith.constant 1.000000e-01 : f32
    %190 = vector.broadcast %cst_78 : f32 to vector<3x51x256xf32>
    %191 = arith.addf %189, %190 : vector<3x51x256xf32>
    %192 = vector.shape_cast %181 : vector<51x256xf32> to vector<1x51x256xf32>
    %193 = vector.broadcast %192 : vector<1x51x256xf32> to vector<3x51x256xf32>
    %194 = arith.addf %191, %193 : vector<3x51x256xf32>
    %cst_79 = arith.constant 8.000000e+00 : f32
    %195 = vector.broadcast %cst_79 : f32 to vector<3x51x256xf32>
    %196 = arith.mulf %194, %195 : vector<3x51x256xf32>
    %197 = arith.negf %185 : vector<3x51x256xf32>
    %198 = math.exp %197 : vector<3x51x256xf32>
    %cst_80 = arith.constant 1.000000e+00 : f32
    %199 = vector.broadcast %cst_80 : f32 to vector<3x51x256xf32>
    %200 = arith.addf %199, %198 : vector<3x51x256xf32>
    %201 = arith.divf %199, %200 : vector<3x51x256xf32>
    %202 = vector.shape_cast %183 : vector<51x1xi1> to vector<1x51x1xi1>
    %203 = vector.broadcast %202 : vector<1x51x1xi1> to vector<3x51x256xi1>
    %204 = arith.select %203, %201, %196 : vector<3x51x256xi1>, vector<3x51x256xf32>
    %c0_81 = arith.constant 0 : index
    %c0_82 = arith.constant 0 : index
    %c0_83 = arith.constant 0 : index
    %c0_84 = arith.constant 0 : index
    %205 = vector.load %arg6[%c0_81, %c0_82, %c0_83, %c0_84] : memref<1x3x51x256xf32, #tpu.memory_space<vmem>>, vector<1x3x51x256xf32>
    %206 = vector.shape_cast %205 : vector<1x3x51x256xf32> to vector<3x51x256xf32>
    %207 = vector.shape_cast %204 : vector<3x51x256xf32> to vector<1x3x51x256xf32>
    tpu.vector_store %arg6[%c0_81, %c0_82, %c0_83, %c0_84], %207 {strides = array<i32>} : memref<1x3x51x256xf32, #tpu.memory_space<vmem>>, vector<1x3x51x256xf32>,
    return
  }
  func.func @transform_0(%arg0: i32, %arg1: i32) -> (i32, i32) {
    %c0_i32 = arith.constant 0 : i32
    %c0_i32_0 = arith.constant 0 : i32
    %c0_i32_1 = arith.constant 0 : i32
    return %c0_i32, %c0_i32_0 : i32, i32
  }
  func.func @transform_1(%arg0: i32, %arg1: i32) -> (i32, i32, i32, i32) {
    %c0_i32 = arith.constant 0 : i32
    %c0_i32_0 = arith.constant 0 : i32
    %c0_i32_1 = arith.constant 0 : i32
    return %arg0, %c0_i32, %c0_i32_0, %arg1 : i32, i32, i32, i32
  }
  func.func @transform_2(%arg0: i32, %arg1: i32) -> (i32, i32, i32, i32) {
    %c0_i32 = arith.constant 0 : i32
    %c0_i32_0 = arith.constant 0 : i32
    %c0_i32_1 = arith.constant 0 : i32
    return %arg0, %c0_i32, %c0_i32_0, %arg1 : i32, i32, i32, i32
  }
  func.func @transform_3(%arg0: i32, %arg1: i32) -> (i32, i32, i32, i32) {
    %c0_i32 = arith.constant 0 : i32
    %c0_i32_0 = arith.constant 0 : i32
    %c0_i32_1 = arith.constant 0 : i32
    return %arg0, %c0_i32, %c0_i32_0, %arg1 : i32, i32, i32, i32
  }
  func.func @transform_4(%arg0: i32, %arg1: i32) -> (i32, i32, i32, i32) {
    %c0_i32 = arith.constant 0 : i32
    %c0_i32_0 = arith.constant 0 : i32
    %c0_i32_1 = arith.constant 0 : i32
    return %arg0, %c0_i32, %c0_i32_0, %arg1 : i32, i32, i32, i32
  }
}

</mosaic_0001>

<llo_original>
// kernel: yolo_seg_keypoint.1
$region0: #{yolo_seg_keypoint.1}
  #allocation0 [shape = 'u32[]', space=smem, size = 0x4, offset = 0x4, fixed_abs, tag = 'smem constant byte address 0x4 - core index']
  #allocation1 [shape = 'u32[144,128]{1,0:T(1,128)}', space=vmem, size = 0x12000, scoped, tag = 'internal scratch']
  %s0 = inlined_call_operand.vmem [shape: f32[3,2], index: 0, kind: input, shape index: {}]
  %s1 = inlined_call_operand.vmem [shape: f32[2,3,37,256], index: 1, kind: input, shape index: {}]
  %s2 = inlined_call_operand.vmem [shape: f32[2,3,51,256], index: 2, kind: input, shape index: {}]
  %s3 = inlined_call_operand.vmem [shape: f32[2,3,37,256], index: 3, kind: output, shape index: {0}]
  %s4 = inlined_call_operand.vmem [shape: f32[2,3,51,256], index: 4, kind: output, shape index: {1}]
  %5 = xla_tuple %s3, %s4
  %s6 = sld [smem:[#allocation0]]
  $region57: #{yolo_seg_keypoint.1} parent=0
    _
  %s8 = ssub.s32 1, %s6
  %s9 = scalar_select 0, %s8, %s6
  $region1: #{yolo_seg_keypoint.1} parent=0
    #allocation2 [shape = 'u8[2048]{0}', space=smem, size = 0x800, scoped, tag = 'input window, operand 0, single buffered']
    #allocation3 [shape = 's32[2]{0}', space=sflag, size = 0x8, scoped, tag = 'scoped memory for yolo_seg_keypoint.1']
    %10 = vsyncpa [#allocation3], 0
    loop: start=0, step=1, limit=4
    $region2: #{yolo_seg_keypoint.1} parent=1 // loop_pre_header
      _
    $region3: #{yolo_seg_keypoint.1} parent=1 // loop_header
      %s12 = sphi 0, %s16
      %p13 = scmp.ge.s32.totalorder %s12, 4
      %s19 = sphi 0, %s31
      %s20 = sphi 0, %s27
      %s21 = sphi 0, %s19
      %s22 = sphi 0, %s20
      %s23 = sphi 0, %s21
      %s24 = sphi 0, %s22
      %s32 = sphi 0, %s32
      %s34 = sphi 0, %s32
      %s35 = sphi 0, %s34
      %s49 = sphi 0, %s35
      %s57 = sphi 0, %s59
      %s60 = sphi 0, %s57
      %s61 = sphi 0, %s60
      %s77 = sphi 0, %s61
      %s85 = sphi 0, %s87
      %s88 = sphi 0, %s85
      %s89 = sphi 0, %s88
      %s105 = sphi 0, %s89
      %s113 = sphi 0, %s115
      %s116 = sphi 0, %s113
      %s117 = sphi 0, %s116
      %s133 = sphi 0, %s117
      %s141 = sphi 0, %s143
      %s144 = sphi 0, %s141
      %s145 = sphi 0, %s144
      %s161 = sphi 0, %s145
    $region4: #{yolo_seg_keypoint.1} parent=1 // loop_header_branch
      %15 = sbr.rel (%p13) target = $region8
    $region5: #{yolo_seg_keypoint.1} parent=1 // loop_body
      %s17 = ssub.s32 %s12, 1
      %s18 = ssub.s32 %s12, 2
      %s25 = sadd.s32 1, %s20
      %p26 = scmp.ge.s32.totalorder %s25, 1
      %s27 = scalar_select %p26, 0, %s25
      %s28 = sadd.s32 1, %s19
      %s29 = scalar_select %p26, %s28, %s19
      %p30 = scmp.ge.s32.totalorder %s29, 2
      %s31 = scalar_select %p30, 0, %s29
      %s33 = sadd.s32 %s32, 1
      %p36 = scmp.eq.s32.totalorder %s12, 1
      %p37 = scmp.ne.s32.totalorder %s32, %s34
      %p38 = scmp.eq.s32.totalorder %s12, 0
      %p39 = por %p37, %p38
      %p40 = scmp.ne.s32.totalorder %s32, %s34
      %p41 = scmp.eq.s32.totalorder %s17, 1
      %p42 = por %p40, %p41
      %p43 = scmp.ne.s32.totalorder %s34, %s35
      %p44 = scmp.eq.s32.totalorder %s17, 0
      %p45 = por %p43, %p44
      %p46 = scmp.ne.s32.totalorder %s34, %s35
      %p47 = scmp.eq.s32.totalorder %s18, 1
      %p48 = por %p46, %p47
      %p50 = scmp.ne.s32.totalorder %s35, %s49
      %p51 = scmp.eq.s32.totalorder %s18, 0
      %p52 = por %p50, %p51
      %s53 = ssub.s32 %s19, %s31
      %s54 = ssub.s32 %s20, %s27
      %s55 = sor.u32 %s53, %s54
      %p56 = scmp.eq.s32.totalorder %s55, 0
      %s58 = sadd.s32 %s57, 1
      %s59 = scalar_select %p56, %s57, %s58
      %p62 = pneg %p56
      %p63 = scmp.eq.s32.totalorder %s12, 1
      %p64 = por %p62, %p63
      %p65 = scmp.ne.s32.totalorder %s57, %s60
      %p66 = scmp.eq.s32.totalorder %s12, 0
      %p67 = por %p65, %p66
      %p68 = scmp.ne.s32.totalorder %s57, %s60
      %p69 = scmp.eq.s32.totalorder %s17, 1
      %p70 = por %p68, %p69
      %p71 = scmp.ne.s32.totalorder %s60, %s61
      %p72 = scmp.eq.s32.totalorder %s17, 0
      %p73 = por %p71, %p72
      %p74 = scmp.ne.s32.totalorder %s60, %s61
      %p75 = scmp.eq.s32.totalorder %s18, 1
      %p76 = por %p74, %p75
      %p78 = scmp.ne.s32.totalorder %s61, %s77
      %p79 = scmp.eq.s32.totalorder %s18, 0
      %p80 = por %p78, %p79
      %s81 = ssub.s32 %s19, %s31
      %s82 = ssub.s32 %s20, %s27
      %s83 = sor.u32 %s81, %s82
      %p84 = scmp.eq.s32.totalorder %s83, 0
      %s86 = sadd.s32 %s85, 1
      %s87 = scalar_select %p84, %s85, %s86
      %p90 = pneg %p84
      %p91 = scmp.eq.s32.totalorder %s12, 1
      %p92 = por %p90, %p91
      %p93 = scmp.ne.s32.totalorder %s85, %s88
      %p94 = scmp.eq.s32.totalorder %s12, 0
      %p95 = por %p93, %p94
      %p96 = scmp.ne.s32.totalorder %s85, %s88
      %p97 = scmp.eq.s32.totalorder %s17, 1
      %p98 = por %p96, %p97
      %p99 = scmp.ne.s32.totalorder %s88, %s89
      %p100 = scmp.eq.s32.totalorder %s17, 0
      %p101 = por %p99, %p100
      %p102 = scmp.ne.s32.totalorder %s88, %s89
      %p103 = scmp.eq.s32.totalorder %s18, 1
      %p104 = por %p102, %p103
      %p106 = scmp.ne.s32.totalorder %s89, %s105
      %p107 = scmp.eq.s32.totalorder %s18, 0
      %p108 = por %p106, %p107
      %s109 = ssub.s32 %s19, %s31
      %s110 = ssub.s32 %s20, %s27
      %s111 = sor.u32 %s109, %s110
      %p112 = scmp.eq.s32.totalorder %s111, 0
      %s114 = sadd.s32 %s113, 1
      %s115 = scalar_select %p112, %s113, %s114
      %p118 = pneg %p112
      %p119 = scmp.eq.s32.totalorder %s12, 1
      %p120 = por %p118, %p119
      %p121 = scmp.ne.s32.totalorder %s113, %s116
      %p122 = scmp.eq.s32.totalorder %s12, 0
      %p123 = por %p121, %p122
      %p124 = scmp.ne.s32.totalorder %s113, %s116
      %p125 = scmp.eq.s32.totalorder %s17, 1
      %p126 = por %p124, %p125
      %p127 = scmp.ne.s32.totalorder %s116, %s117
      %p128 = scmp.eq.s32.totalorder %s17, 0
      %p129 = por %p127, %p128
      %p130 = scmp.ne.s32.totalorder %s116, %s117
      %p131 = scmp.eq.s32.totalorder %s18, 1
      %p132 = por %p130, %p131
      %p134 = scmp.ne.s32.totalorder %s117, %s133
      %p135 = scmp.eq.s32.totalorder %s18, 0
      %p136 = por %p134, %p135
      %s137 = ssub.s32 %s19, %s31
      %s138 = ssub.s32 %s20, %s27
      %s139 = sor.u32 %s137, %s138
      %p140 = scmp.eq.s32.totalorder %s139, 0
      %s142 = sadd.s32 %s141, 1
      %s143 = scalar_select %p140, %s141, %s142
      %p146 = pneg %p140
      %p147 = scmp.eq.s32.totalorder %s12, 1
      %p148 = por %p146, %p147
      %p149 = scmp.ne.s32.totalorder %s141, %s144
      %p150 = scmp.eq.s32.totalorder %s12, 0
      %p151 = por %p149, %p150
      %p152 = scmp.ne.s32.totalorder %s141, %s144
      %p153 = scmp.eq.s32.totalorder %s17, 1
      %p154 = por %p152, %p153
      %p155 = scmp.ne.s32.totalorder %s144, %s145
      %p156 = scmp.eq.s32.totalorder %s17, 0
      %p157 = por %p155, %p156
      %p158 = scmp.ne.s32.totalorder %s144, %s145
      %p159 = scmp.eq.s32.totalorder %s18, 1
      %p160 = por %p158, %p159
      %p162 = scmp.ne.s32.totalorder %s145, %s161
      %p163 = scmp.eq.s32.totalorder %s18, 0
      %p164 = por %p162, %p163
      %p165 = scmp.le.s32.totalorder 1, %s12
      %p166 = scmp.lt.s32.totalorder %s12, 3
      %p167 = pnand %p165, %p166
      %p168 = pneg %p167
      // Predicated region
      $region9: #{yolo_seg_keypoint.1} parent=5 // pred_check
        _
      $region10: #{yolo_seg_keypoint.1} parent=5 // pred_check_branch
        %170 = sbr.rel (%p167) target = $region12
      $region11: #{yolo_seg_keypoint.1} parent=5 // pred_region
        %s171 = ssub.s32 %s12, 1
        // Predicated region
        $region13: #{yolo_seg_keypoint.1} parent=11 // pred_check
          %p172 = pneg %p45
        $region14: #{yolo_seg_keypoint.1} parent=11 // pred_check_branch
          %174 = sbr.rel (%p172) target = $region16
        $region15: #{yolo_seg_keypoint.1} parent=11 // pred_region
          %s176 = ssub.s32 64, 64
          %177 = vsyncadd [#allocation3], %s176
          %s179 = sshll.u32 %s0, 4
          %s180 = int_to_ptr.vmem [resolvable:$true] %s179
          %182 = dma.vmem_to_smem %s180, 64, [#allocation2], [#allocation3]
        $region16: #{yolo_seg_keypoint.1} parent=11 // pred_fallthru
          _
      $region12: #{yolo_seg_keypoint.1} parent=5 // pred_fallthru
        _
      %p183 = scmp.lt.s32.totalorder %s12, 2
      // Predicated region
      $region17: #{yolo_seg_keypoint.1} parent=5 // pred_check
        %p184 = pneg %p183
      $region18: #{yolo_seg_keypoint.1} parent=5 // pred_check_branch
        %186 = sbr.rel (%p184) target = $region20
      $region19: #{yolo_seg_keypoint.1} parent=5 // pred_region
        // Predicated region
        $region21: #{yolo_seg_keypoint.1} parent=19 // pred_check
          %p187 = pneg %p67
        $region22: #{yolo_seg_keypoint.1} parent=19 // pred_check_branch
          %189 = sbr.rel (%p187) target = $region24
        $region23: #{yolo_seg_keypoint.1} parent=19 // pred_region
          %s190 = smul.u32 2, %s20
          %p191 = scmp.lt.s32.totalorder %s19, 1
          %s192 = scalar_select %p191, %s19, 1
          %p193 = scmp.lt.s32.totalorder %s190, 1
          %s194 = scalar_select %p193, %s190, 1
          %s195 = smul.addr %s192, 30
          %s196 = sadd.s32 %s194, %s195
          %s197 = smul.addr %s196, 8
          %s198 = scalar_lea.vmem %s1, %s197
          %s199 = smul.u32 2, %s20
        $region24: #{yolo_seg_keypoint.1} parent=19 // pred_fallthru
          _
        // Predicated region
        $region25: #{yolo_seg_keypoint.1} parent=19 // pred_check
          %p200 = pneg %p95
        $region26: #{yolo_seg_keypoint.1} parent=19 // pred_check_branch
          %202 = sbr.rel (%p200) target = $region28
        $region27: #{yolo_seg_keypoint.1} parent=19 // pred_region
          %s203 = smul.u32 2, %s20
          %p204 = scmp.lt.s32.totalorder %s19, 1
          %s205 = scalar_select %p204, %s19, 1
          %p206 = scmp.lt.s32.totalorder %s203, 1
          %s207 = scalar_select %p206, %s203, 1
          %s208 = smul.addr %s205, 42
          %s209 = sadd.s32 %s207, %s208
          %s210 = smul.addr %s209, 8
          %s211 = scalar_lea.vmem %s2, %s210
          %s212 = smul.u32 2, %s20
        $region28: #{yolo_seg_keypoint.1} parent=19 // pred_fallthru
          _
      $region20: #{yolo_seg_keypoint.1} parent=5 // pred_fallthru
        _
      %p213 = scmp.le.s32.totalorder 1, %s12
      %p214 = scmp.lt.s32.totalorder %s12, 3
      %p215 = pnand %p213, %p214
      %p216 = pneg %p215
      // Predicated region
      $region29: #{yolo_seg_keypoint.1} parent=5 // pred_check
        _
      $region30: #{yolo_seg_keypoint.1} parent=5 // pred_check_branch
        %218 = sbr.rel (%p215) target = $region32
      $region31: #{yolo_seg_keypoint.1} parent=5 // pred_region
        %s219 = ssub.s32 %s12, 1
        // Predicated region
        $region33: #{yolo_seg_keypoint.1} parent=31 // pred_check
          %p220 = pneg %p45
        $region34: #{yolo_seg_keypoint.1} parent=31 // pred_check_branch
          %222 = sbr.rel (%p220) target = $region36
        $region35: #{yolo_seg_keypoint.1} parent=31 // pred_region
          %223 = dma.done [#allocation3], 64
        $region36: #{yolo_seg_keypoint.1} parent=31 // pred_fallthru
          _
        %224 = sfence
        %p225 = pneg %p45
        %p226 = pneg %p42
        %s227 = smul.u32 2, %s22
        %p228 = scmp.lt.s32.totalorder %s21, 1
        %s229 = scalar_select %p228, %s21, 1
        %p230 = scmp.lt.s32.totalorder %s227, 1
        %s231 = scalar_select %p230, %s227, 1
        %s232 = smul.addr %s229, 30
        %s233 = sadd.s32 %s231, %s232
        %s234 = smul.addr %s233, 8
        %s235 = scalar_lea.vmem %s1, %s234
        %p236 = pneg %p73
        %p237 = pneg %p70
        %s238 = smul.u32 2, %s22
        %p239 = scmp.lt.s32.totalorder %s21, 1
        %s240 = scalar_select %p239, %s21, 1
        %p241 = scmp.lt.s32.totalorder %s238, 1
        %s242 = scalar_select %p241, %s238, 1
        %s243 = smul.addr %s240, 42
        %s244 = sadd.s32 %s242, %s243
        %s245 = smul.addr %s244, 8
        %s246 = scalar_lea.vmem %s2, %s245
        %p247 = pneg %p101
        %p248 = pneg %p98
        %p249 = pneg %p129
        %p250 = pneg %p126
        %s251 = smul.u32 2, %s22
        %p252 = scmp.lt.s32.totalorder %s21, 1
        %s253 = scalar_select %p252, %s21, 1
        %p254 = scmp.lt.s32.totalorder %s251, 1
        %s255 = scalar_select %p254, %s251, 1
        %s256 = smul.addr %s253, 30
        %s257 = sadd.s32 %s255, %s256
        %s258 = smul.addr %s257, 8
        %s259 = scalar_lea.vmem %s3, %s258
        %p260 = pneg %p157
        %p261 = pneg %p154
        %s262 = smul.u32 2, %s22
        %p263 = scmp.lt.s32.totalorder %s21, 1
        %s264 = scalar_select %p263, %s21, 1
        %p265 = scmp.lt.s32.totalorder %s262, 1
        %s266 = scalar_select %p265, %s262, 1
        %s267 = smul.addr %s264, 42
        %s268 = sadd.s32 %s266, %s267
        %s269 = smul.addr %s268, 8
        %s270 = scalar_lea.vmem %s4, %s269
        %s271 = smul.u32 2, %s22
        %p272 = scmp.lt.s32.totalorder %s21, 1
        %s273 = scalar_select %p272, %s21, 1
        %p274 = scmp.lt.s32.totalorder %s271, 1
        %s275 = scalar_select %p274, %s271, 1
        %s276 = smul.addr %s273, 30
        %s277 = sadd.s32 %s275, %s276
        %s278 = smul.addr %s277, 8
        %s279 = scalar_lea.vmem %s1, %s278
        %s280 = smul.u32 2, %s22
        %s281 = smul.u32 2, %s22
        %p282 = scmp.lt.s32.totalorder %s21, 1
        %s283 = scalar_select %p282, %s21, 1
        %p284 = scmp.lt.s32.totalorder %s281, 1
        %s285 = scalar_select %p284, %s281, 1
        %s286 = smul.addr %s283, 42
        %s287 = sadd.s32 %s285, %s286
        %s288 = smul.addr %s287, 8
        %s289 = scalar_lea.vmem %s2, %s288
        %s290 = smul.u32 2, %s22
        %s291 = smul.u32 2, %s22
        %p292 = scmp.lt.s32.totalorder %s21, 1
        %s293 = scalar_select %p292, %s21, 1
        %p294 = scmp.lt.s32.totalorder %s291, 1
        %s295 = scalar_select %p294, %s291, 1
        %s296 = smul.addr %s293, 30
        %s297 = sadd.s32 %s295, %s296
        %s298 = smul.addr %s297, 8
        %s299 = scalar_lea.vmem %s3, %s298
        %s300 = smul.u32 2, %s22
        %s301 = smul.u32 2, %s22
        %p302 = scmp.lt.s32.totalorder %s21, 1
        %s303 = scalar_select %p302, %s21, 1
        %p304 = scmp.lt.s32.totalorder %s301, 1
        %s305 = scalar_select %p304, %s301, 1
        %s306 = smul.addr %s303, 42
        %s307 = sadd.s32 %s305, %s306
        %s308 = smul.addr %s307, 8
        %s309 = scalar_lea.vmem %s4, %s308
        %s310 = smul.u32 2, %s22
        %s311 = smul.u32 %s22, 256
        %v312 = vlaneseq
        %v313 = vand.u32 %v312, 127
        %v314 = vadd.s32 %v313, 128
        %v315 = vstv %s311
        %v316 = vadd.s32 %v313, %v315
        %v317 = vadd.s32 %v314, %v315
        %v318 = vcvt.s32.f32 %v316
        %v319 = vcvt.s32.f32 %v317
        %v320 = vadd.f32 %v318, 0.5
        %v321 = vadd.f32 %v319, 0.5
        %v322 = vmul.f32 %v320, 0.0625
        %v323 = vmul.f32 %v321, 0.0625
        %v324 = vfloor.f32 %v322
        %v325 = vfloor.f32 %v323
        %v326 = vmul.f32 %v324, 16.0
        %v327 = vmul.f32 %v325, 16.0
        %v328 = vsub.f32 %v318, %v326
        %v329 = vsub.f32 %v319, %v327
        %v330 = vld [vmem:[%s279] sm:$0xff]
        %v331 = vld [vmem:[%s279 + $0x8] sm:$0xff]
        %v332 = vld [vmem:[%s279 + $0x10] sm:$0xff]
        %v333 = vld [vmem:[%s279 + $0x18] sm:$0xff]
        %v334 = vld [vmem:[%s279 + $0x20] sm:$0xff]
        %v335 = vld [vmem:[%s279 + $0x28] sm:$0xff]
        %v336 = vld [vmem:[%s279 + $0x30] sm:$0xff]
        %v337 = vld [vmem:[%s279 + $0x38] sm:$0xff]
        %v338 = vld [vmem:[%s279 + $0x40] sm:$0x1f]
        %v339 = vld [vmem:[%s279 + $0x48] sm:$0x1f]
        %v340 = vld [vmem:[%s279 + $0x50] sm:$0xff]
        %v341 = vld [vmem:[%s279 + $0x58] sm:$0xff]
        %v342 = vld [vmem:[%s279 + $0x60] sm:$0xff]
        %v343 = vld [vmem:[%s279 + $0x68] sm:$0xff]
        %v344 = vld [vmem:[%s279 + $0x70] sm:$0xff]
        %v345 = vld [vmem:[%s279 + $0x78] sm:$0xff]
        %v346 = vld [vmem:[%s279 + $0x80] sm:$0xff]
        %v347 = vld [vmem:[%s279 + $0x88] sm:$0xff]
        %v348 = vld [vmem:[%s279 + $0x90] sm:$0x1f]
        %v349 = vld [vmem:[%s279 + $0x98] sm:$0x1f]
        %v350 = vld [vmem:[%s279 + $0xa0] sm:$0xff]
        %v351 = vld [vmem:[%s279 + $0xa8] sm:$0xff]
        %v352 = vld [vmem:[%s279 + $0xb0] sm:$0xff]
        %v353 = vld [vmem:[%s279 + $0xb8] sm:$0xff]
        %v354 = vld [vmem:[%s279 + $0xc0] sm:$0xff]
        %v355 = vld [vmem:[%s279 + $0xc8] sm:$0xff]
        %v356 = vld [vmem:[%s279 + $0xd0] sm:$0xff]
        %v357 = vld [vmem:[%s279 + $0xd8] sm:$0xff]
        %v358 = vld [vmem:[%s279 + $0xe0] sm:$0x1f]
        %v359 = vld [vmem:[%s279 + $0xe8] sm:$0x1f]
        %360 = vst [vmem:[%s299] sm:$0xff] %v330
        %361 = vst [vmem:[%s299 + $0x8] sm:$0xff] %v331
        %362 = vst [vmem:[%s299 + $0x10] sm:$0xff] %v332
        %363 = vst [vmem:[%s299 + $0x18] sm:$0xff] %v333
        %364 = vst [vmem:[%s299 + $0x20] sm:$0xff] %v334
        %365 = vst [vmem:[%s299 + $0x28] sm:$0xff] %v335
        %366 = vst [vmem:[%s299 + $0x30] sm:$0xff] %v336
        %367 = vst [vmem:[%s299 + $0x38] sm:$0xff] %v337
        %368 = vst [vmem:[%s299 + $0x40] sm:$0x1f] %v338
        %369 = vst [vmem:[%s299 + $0x48] sm:$0x1f] %v339
        %370 = vst [vmem:[%s299 + $0x50] sm:$0xff] %v340
        %371 = vst [vmem:[%s299 + $0x58] sm:$0xff] %v341
        %372 = vst [vmem:[%s299 + $0x60] sm:$0xff] %v342
        %373 = vst [vmem:[%s299 + $0x68] sm:$0xff] %v343
        %374 = vst [vmem:[%s299 + $0x70] sm:$0xff] %v344
        %375 = vst [vmem:[%s299 + $0x78] sm:$0xff] %v345
        %376 = vst [vmem:[%s299 + $0x80] sm:$0xff] %v346
        %377 = vst [vmem:[%s299 + $0x88] sm:$0xff] %v347
        %378 = vst [vmem:[%s299 + $0x90] sm:$0x1f] %v348
        %379 = vst [vmem:[%s299 + $0x98] sm:$0x1f] %v349
        %380 = vst [vmem:[%s299 + $0xa0] sm:$0xff] %v350
        %381 = vst [vmem:[%s299 + $0xa8] sm:$0xff] %v351
        %382 = vst [vmem:[%s299 + $0xb0] sm:$0xff] %v352
        %383 = vst [vmem:[%s299 + $0xb8] sm:$0xff] %v353
        %384 = vst [vmem:[%s299 + $0xc0] sm:$0xff] %v354
        %385 = vst [vmem:[%s299 + $0xc8] sm:$0xff] %v355
        %386 = vst [vmem:[%s299 + $0xd0] sm:$0xff] %v356
        %387 = vst [vmem:[%s299 + $0xd8] sm:$0xff] %v357
        %388 = vst [vmem:[%s299 + $0xe0] sm:$0x1f] %v358
        %389 = vst [vmem:[%s299 + $0xe8] sm:$0x1f] %v359
        %v390 = vlaneseq
        %v391 = vshrl.u32 %v390, 7
        %vm392 = vcmp.eq.s32.totalorder %v391, 0
        %vm393 = vcmp.eq.s32.totalorder %v391, 1
        %v394 = vsel %vm393, 1, 0
        %vm395 = vcmp.eq.s32.totalorder %v394, 1
        %v396 = vsel %vm395, %v324, 0.0
        %v397 = vsel %vm395, %v325, 0.0
        %v398 = vsel %vm392, 1, 0
        %vm399 = vcmp.eq.s32.totalorder %v398, 1
        %v400 = vsel %vm399, %v328, %v396
        %v401 = vsel %vm399, %v329, %v397
        %s402 = sld [smem:[#allocation2]]
        %s403 = sld [smem:[#allocation2 + $0x1]]
        %vm404 = vcmp.eq.s32.totalorder %v391, 2
        %vm405 = vcmp.eq.s32.totalorder %v391, 3
        %v406 = vstv %s403
        %v407 = vsel %vm405, %v406, 0.0
        %v408 = vstv %s402
        %v409 = vsel %vm404, %v408, %v407
        %v410 = vld [vmem:[%s279] sm:$0xff]
        %v411 = vld [vmem:[%s279 + $0x8] sm:$0xff]
        %v412 = vxor.u32 %v410, 2147483648
        %v413 = vxor.u32 %v411, 2147483648
        %v414 = vmul.f32 %v412, 1.442695
        %v415 = vpow.pop %v414
        %v416 = vmul.f32 %v413, 1.442695
        %v417 = vpow.pop %v416
        %v418 = vadd.f32 %v415, 1.0
        %v419 = vadd.f32 %v417, 1.0
        %v420 = vrcp.pop %v418
        %v421 = vmul.f32 1.0, %v420
        %v422 = vrcp.pop %v419
        %v423 = vmul.f32 1.0, %v422
        %v424 = vadd.f32 %v421, %v400
        %v425 = vadd.f32 %v423, %v401
        %v426 = vmul.f32 %v424, 8.0
        %v427 = vmul.f32 %v425, 8.0
        %v428 = vmul.f32 %v410, 1.442695
        %v429 = vpow.pop %v428
        %v430 = vmul.f32 %v411, 1.442695
        %v431 = vpow.pop %v430
        %v432 = vmul.f32 %v429, %v409
        %v433 = vmul.f32 %v431, %v409
        %vm434 = vcmp.lt.s32.totalorder %v391, 2
        %vm435 = vcmp.lt.s32.totalorder %v391, 4
        %vm436 = vcmp.eq.s32.totalorder %v391, 4
        %v437 = vsel %vm436, 1, 0
        %vm438 = vcmp.eq.s32.totalorder %v437, 1
        %v439 = vsel %vm438, %v421, %v410
        %v440 = vsel %vm438, %v423, %v411
        %v441 = vsel %vm435, 1, 0
        %vm442 = vcmp.eq.s32.totalorder %v441, 1
        %v443 = vsel %vm442, %v432, %v439
        %v444 = vsel %vm442, %v433, %v440
        %v445 = vsel %vm434, 1, 0
        %vm446 = vcmp.eq.s32.totalorder %v445, 1
        %v447 = vsel %vm446, %v426, %v443
        %v448 = vsel %vm446, %v427, %v444
        %449 = vst [vmem:[%s299] sm:$0xff] %v447
        %450 = vst [vmem:[%s299 + $0x8] sm:$0xff] %v448
        %s451 = sld [smem:[#allocation2 + $0x80]]
        %s452 = sld [smem:[#allocation2 + $0x81]]
        %v453 = vstv %s452
        %v454 = vsel %vm405, %v453, 0.0
        %v455 = vstv %s451
        %v456 = vsel %vm404, %v455, %v454
        %s457 = scalar_lea.vmem %s279, 80
        %v458 = vld [vmem:[%s457] sm:$0xff]
        %v459 = vld [vmem:[%s457 + $0x8] sm:$0xff]
        %v460 = vxor.u32 %v458, 2147483648
        %v461 = vxor.u32 %v459, 2147483648
        %v462 = vmul.f32 %v460, 1.442695
        %v463 = vpow.pop %v462
        %v464 = vmul.f32 %v461, 1.442695
        %v465 = vpow.pop %v464
        %v466 = vadd.f32 %v463, 1.0
        %v467 = vadd.f32 %v465, 1.0
        %v468 = vrcp.pop %v466
        %v469 = vmul.f32 1.0, %v468
        %v470 = vrcp.pop %v467
        %v471 = vmul.f32 1.0, %v470
        %v472 = vadd.f32 %v469, %v400
        %v473 = vadd.f32 %v471, %v401
        %v474 = vmul.f32 %v472, 8.0
        %v475 = vmul.f32 %v473, 8.0
        %v476 = vmul.f32 %v458, 1.442695
        %v477 = vpow.pop %v476
        %v478 = vmul.f32 %v459, 1.442695
        %v479 = vpow.pop %v478
        %v480 = vmul.f32 %v477, %v456
        %v481 = vmul.f32 %v479, %v456
        %v482 = vsel %vm438, %v469, %v458
        %v483 = vsel %vm438, %v471, %v459
        %v484 = vsel %vm442, %v480, %v482
        %v485 = vsel %vm442, %v481, %v483
        %v486 = vsel %vm446, %v474, %v484
        %v487 = vsel %vm446, %v475, %v485
        %s488 = scalar_lea.vmem %s299, 80
        %489 = vst [vmem:[%s488] sm:$0xff] %v486
        %490 = vst [vmem:[%s488 + $0x8] sm:$0xff] %v487
        %s491 = sld [smem:[#allocation2 + $0x100]]
        %s492 = sld [smem:[#allocation2 + $0x101]]
        %v493 = vstv %s492
        %v494 = vsel %vm405, %v493, 0.0
        %v495 = vstv %s491
        %v496 = vsel %vm404, %v495, %v494
        %s497 = scalar_lea.vmem %s279, 160
        %v498 = vld [vmem:[%s497] sm:$0xff]
        %v499 = vld [vmem:[%s497 + $0x8] sm:$0xff]
        %v500 = vxor.u32 %v498, 2147483648
        %v501 = vxor.u32 %v499, 2147483648
        %v502 = vmul.f32 %v500, 1.442695
        %v503 = vpow.pop %v502
        %v504 = vmul.f32 %v501, 1.442695
        %v505 = vpow.pop %v504
        %v506 = vadd.f32 %v503, 1.0
        %v507 = vadd.f32 %v505, 1.0
        %v508 = vrcp.pop %v506
        %v509 = vmul.f32 1.0, %v508
        %v510 = vrcp.pop %v507
        %v511 = vmul.f32 1.0, %v510
        %v512 = vadd.f32 %v509, %v400
        %v513 = vadd.f32 %v511, %v401
        %v514 = vmul.f32 %v512, 8.0
        %v515 = vmul.f32 %v513, 8.0
        %v516 = vmul.f32 %v498, 1.442695
        %v517 = vpow.pop %v516
        %v518 = vmul.f32 %v499, 1.442695
        %v519 = vpow.pop %v518
        %v520 = vmul.f32 %v517, %v496
        %v521 = vmul.f32 %v519, %v496
        %v522 = vsel %vm438, %v509, %v498
        %v523 = vsel %vm438, %v511, %v499
        %v524 = vsel %vm442, %v520, %v522
        %v525 = vsel %vm442, %v521, %v523
        %v526 = vsel %vm446, %v514, %v524
        %v527 = vsel %vm446, %v515, %v525
        %s528 = scalar_lea.vmem %s299, 160
        %529 = vst [vmem:[%s528] sm:$0xff] %v526
        %530 = vst [vmem:[%s528 + $0x8] sm:$0xff] %v527
        %v531 = vadd.s32 %v391, 8
        %v532 = vadd.s32 %v391, 16
        %v533 = vadd.s32 %v391, 24
        %v534 = vadd.s32 %v391, 32
        %v535 = vadd.s32 %v391, 40
        %v536 = vadd.s32 %v391, 48
        %v537 = vcvt.s32.f32 %v391
        %v538 = vcvt.s32.f32 %v531
        %v539 = vcvt.s32.f32 %v532
        %v540 = vcvt.s32.f32 %v533
        %v541 = vcvt.s32.f32 %v534
        %v542 = vcvt.s32.f32 %v535
        %v543 = vcvt.s32.f32 %v536
        %v544 = vadd.f32 %v537, 0.5
        %v545 = vadd.f32 %v538, 0.5
        %v546 = vadd.f32 %v539, 0.5
        %v547 = vadd.f32 %v540, 0.5
        %v548 = vadd.f32 %v541, 0.5
        %v549 = vadd.f32 %v542, 0.5
        %v550 = vadd.f32 %v543, 0.5
        %v551 = vmul.f32 %v544, 0.33333334
        %v552 = vmul.f32 %v545, 0.33333334
        %v553 = vmul.f32 %v546, 0.33333334
        %v554 = vmul.f32 %v547, 0.33333334
        %v555 = vmul.f32 %v548, 0.33333334
        %v556 = vmul.f32 %v549, 0.33333334
        %v557 = vmul.f32 %v550, 0.33333334
        %v558 = vfloor.f32 %v551
        %v559 = vfloor.f32 %v552
        %v560 = vfloor.f32 %v553
        %v561 = vfloor.f32 %v554
        %v562 = vfloor.f32 %v555
        %v563 = vfloor.f32 %v556
        %v564 = vfloor.f32 %v557
        %v565 = vmul.f32 %v558, 3.0
        %v566 = vmul.f32 %v559, 3.0
        %v567 = vmul.f32 %v560, 3.0
        %v568 = vmul.f32 %v561, 3.0
        %v569 = vmul.f32 %v562, 3.0
        %v570 = vmul.f32 %v563, 3.0
        %v571 = vmul.f32 %v564, 3.0
        %v572 = vsub.f32 %v537, %v565
        %v573 = vsub.f32 %v538, %v566
        %v574 = vsub.f32 %v539, %v567
        %v575 = vsub.f32 %v540, %v568
        %v576 = vsub.f32 %v541, %v569
        %v577 = vsub.f32 %v542, %v570
        %v578 = vsub.f32 %v543, %v571
        %vm579 = vcmp.lt.f32.partialorder %v572, 0.5
        %vm580 = vcmp.lt.f32.partialorder %v573, 0.5
        %vm581 = vcmp.lt.f32.partialorder %v574, 0.5
        %vm582 = vcmp.lt.f32.partialorder %v575, 0.5
        %vm583 = vcmp.lt.f32.partialorder %v576, 0.5
        %vm584 = vcmp.lt.f32.partialorder %v577, 0.5
        %vm585 = vcmp.lt.f32.partialorder %v578, 0.5
        %vm586 = vcmp.lt.f32.partialorder %v572, 1.5
        %vm587 = vcmp.lt.f32.partialorder %v573, 1.5
        %vm588 = vcmp.lt.f32.partialorder %v574, 1.5
        %vm589 = vcmp.lt.f32.partialorder %v575, 1.5
        %vm590 = vcmp.lt.f32.partialorder %v576, 1.5
        %vm591 = vcmp.lt.f32.partialorder %v577, 1.5
        %vm592 = vcmp.lt.f32.partialorder %v578, 1.5
        %v593 = vsel %vm586, 1, 0
        %v594 = vsel %vm587, 1, 0
        %v595 = vsel %vm588, 1, 0
        %v596 = vsel %vm589, 1, 0
        %v597 = vsel %vm590, 1, 0
        %v598 = vsel %vm591, 1, 0
        %v599 = vsel %vm592, 1, 0
        %vm600 = vcmp.eq.s32.totalorder %v593, 1
        %vm601 = vcmp.eq.s32.totalorder %v594, 1
        %vm602 = vcmp.eq.s32.totalorder %v595, 1
        %vm603 = vcmp.eq.s32.totalorder %v596, 1
        %vm604 = vcmp.eq.s32.totalorder %v597, 1
        %vm605 = vcmp.eq.s32.totalorder %v598, 1
        %vm606 = vcmp.eq.s32.totalorder %v599, 1
        %v607 = vsel %vm600, %v324, 0.0
        %v608 = vsel %vm600, %v325, 0.0
        %v609 = vsel %vm601, %v324, 0.0
        %v610 = vsel %vm601, %v325, 0.0
        %v611 = vsel %vm602, %v324, 0.0
        %v612 = vsel %vm602, %v325, 0.0
        %v613 = vsel %vm603, %v324, 0.0
        %v614 = vsel %vm603, %v325, 0.0
        %v615 = vsel %vm604, %v324, 0.0
        %v616 = vsel %vm604, %v325, 0.0
        %v617 = vsel %vm605, %v324, 0.0
        %v618 = vsel %vm605, %v325, 0.0
        %v619 = vsel %vm606, %v324, 0.0
        %v620 = vsel %vm606, %v325, 0.0
        %v621 = vsel %vm579, 1, 0
        %v622 = vsel %vm580, 1, 0
        %v623 = vsel %vm581, 1, 0
        %v624 = vsel %vm582, 1, 0
        %v625 = vsel %vm583, 1, 0
        %v626 = vsel %vm584, 1, 0
        %v627 = vsel %vm585, 1, 0
        %vm628 = vcmp.eq.s32.totalorder %v621, 1
        %vm629 = vcmp.eq.s32.totalorder %v622, 1
        %vm630 = vcmp.eq.s32.totalorder %v623, 1
        %vm631 = vcmp.eq.s32.totalorder %v624, 1
        %vm632 = vcmp.eq.s32.totalorder %v625, 1
        %vm633 = vcmp.eq.s32.totalorder %v626, 1
        %vm634 = vcmp.eq.s32.totalorder %v627, 1
        %v635 = vsel %vm628, %v328, %v607
        %v636 = vsel %vm628, %v329, %v608
        %v637 = vsel %vm629, %v328, %v609
        %v638 = vsel %vm629, %v329, %v610
        %v639 = vsel %vm630, %v328, %v611
        %v640 = vsel %vm630, %v329, %v612
        %v641 = vsel %vm631, %v328, %v613
        %v642 = vsel %vm631, %v329, %v614
        %v643 = vsel %vm632, %v328, %v615
        %v644 = vsel %vm632, %v329, %v616
        %v645 = vsel %vm633, %v328, %v617
        %v646 = vsel %vm633, %v329, %v618
        %v647 = vsel %vm634, %v328, %v619
        %v648 = vsel %vm634, %v329, %v620
        %vm649 = vcmp.gt.f32.partialorder %v572, 1.5
        %vm650 = vcmp.gt.f32.partialorder %v573, 1.5
        %vm651 = vcmp.gt.f32.partialorder %v574, 1.5
        %vm652 = vcmp.gt.f32.partialorder %v575, 1.5
        %vm653 = vcmp.gt.f32.partialorder %v576, 1.5
        %vm654 = vcmp.gt.f32.partialorder %v577, 1.5
        %vm655 = vcmp.gt.f32.partialorder %v578, 1.5
        %v656 = vld [vmem:[%s289] sm:$0xff]
        %v657 = vld [vmem:[%s289 + $0x8] sm:$0xff]
        %v658 = vld [vmem:[%s289 + $0x10] sm:$0xff]
        %v659 = vld [vmem:[%s289 + $0x18] sm:$0xff]
        %v660 = vld [vmem:[%s289 + $0x20] sm:$0xff]
        %v661 = vld [vmem:[%s289 + $0x28] sm:$0xff]
        %v662 = vld [vmem:[%s289 + $0x30] sm:$0xff]
        %v663 = vld [vmem:[%s289 + $0x38] sm:$0xff]
        %v664 = vld [vmem:[%s289 + $0x40] sm:$0xff]
        %v665 = vld [vmem:[%s289 + $0x48] sm:$0xff]
        %v666 = vld [vmem:[%s289 + $0x50] sm:$0xff]
        %v667 = vld [vmem:[%s289 + $0x58] sm:$0xff]
        %v668 = vld [vmem:[%s289 + $0x60] sm:$0x7]
        %v669 = vld [vmem:[%s289 + $0x68] sm:$0x7]
        %v670 = vld [vmem:[%s289 + $0x70] sm:$0xff]
        %v671 = vld [vmem:[%s289 + $0x78] sm:$0xff]
        %v672 = vld [vmem:[%s289 + $0x80] sm:$0xff]
        %v673 = vld [vmem:[%s289 + $0x88] sm:$0xff]
        %v674 = vld [vmem:[%s289 + $0x90] sm:$0xff]
        %v675 = vld [vmem:[%s289 + $0x98] sm:$0xff]
        %v676 = vld [vmem:[%s289 + $0xa0] sm:$0xff]
        %v677 = vld [vmem:[%s289 + $0xa8] sm:$0xff]
        %v678 = vld [vmem:[%s289 + $0xb0] sm:$0xff]
        %v679 = vld [vmem:[%s289 + $0xb8] sm:$0xff]
        %v680 = vld [vmem:[%s289 + $0xc0] sm:$0xff]
        %v681 = vld [vmem:[%s289 + $0xc8] sm:$0xff]
        %v682 = vld [vmem:[%s289 + $0xd0] sm:$0x7]
        %v683 = vld [vmem:[%s289 + $0xd8] sm:$0x7]
        %v684 = vld [vmem:[%s289 + $0xe0] sm:$0xff]
        %v685 = vld [vmem:[%s289 + $0xe8] sm:$0xff]
        %v686 = vld [vmem:[%s289 + $0xf0] sm:$0xff]
        %v687 = vld [vmem:[%s289 + $0xf8] sm:$0xff]
        %v688 = vld [vmem:[%s289 + $0x100] sm:$0xff]
        %v689 = vld [vmem:[%s289 + $0x108] sm:$0xff]
        %v690 = vld [vmem:[%s289 + $0x110] sm:$0xff]
        %v691 = vld [vmem:[%s289 + $0x118] sm:$0xff]
        %v692 = vld [vmem:[%s289 + $0x120] sm:$0xff]
        %v693 = vld [vmem:[%s289 + $0x128] sm:$0xff]
        %v694 = vld [vmem:[%s289 + $0x130] sm:$0xff]
        %v695 = vld [vmem:[%s289 + $0x138] sm:$0xff]
        %v696 = vld [vmem:[%s289 + $0x140] sm:$0x7]
        %v697 = vld [vmem:[%s289 + $0x148] sm:$0x7]
        %v698 = vmul.f32 %v656, 2.0
        %v699 = vmul.f32 %v657, 2.0
        %v700 = vmul.f32 %v658, 2.0
        %v701 = vmul.f32 %v659, 2.0
        %v702 = vmul.f32 %v660, 2.0
        %v703 = vmul.f32 %v661, 2.0
        %v704 = vmul.f32 %v662, 2.0
        %v705 = vmul.f32 %v663, 2.0
        %v706 = vmul.f32 %v664, 2.0
        %v707 = vmul.f32 %v665, 2.0
        %v708 = vmul.f32 %v666, 2.0
        %v709 = vmul.f32 %v667, 2.0
        %v710 = vmul.f32 %v668, 2.0
        %v711 = vmul.f32 %v669, 2.0
        %v712 = vmul.f32 %v670, 2.0
        %v713 = vmul.f32 %v671, 2.0
        %v714 = vmul.f32 %v672, 2.0
        %v715 = vmul.f32 %v673, 2.0
        %v716 = vmul.f32 %v674, 2.0
        %v717 = vmul.f32 %v675, 2.0
        %v718 = vmul.f32 %v676, 2.0
        %v719 = vmul.f32 %v677, 2.0
        %v720 = vmul.f32 %v678, 2.0
        %v721 = vmul.f32 %v679, 2.0
        %v722 = vmul.f32 %v680, 2.0
        %v723 = vmul.f32 %v681, 2.0
        %v724 = vmul.f32 %v682, 2.0
        %v725 = vmul.f32 %v683, 2.0
        %v726 = vmul.f32 %v684, 2.0
        %v727 = vmul.f32 %v685, 2.0
        %v728 = vmul.f32 %v686, 2.0
        %v729 = vmul.f32 %v687, 2.0
        %v730 = vmul.f32 %v688, 2.0
        %v731 = vmul.f32 %v689, 2.0
        %v732 = vmul.f32 %v690, 2.0
        %v733 = vmul.f32 %v691, 2.0
        %v734 = vmul.f32 %v692, 2.0
        %v735 = vmul.f32 %v693, 2.0
        %v736 = vmul.f32 %v694, 2.0
        %v737 = vmul.f32 %v695, 2.0
        %v738 = vmul.f32 %v696, 2.0
        %v739 = vmul.f32 %v697, 2.0
        %v740 = vsub.f32 %v698, 0.6
        %v741 = vsub.f32 %v699, 0.6
        %v742 = vsub.f32 %v700, 0.6
        %v743 = vsub.f32 %v701, 0.6
        %v744 = vsub.f32 %v702, 0.6
        %v745 = vsub.f32 %v703, 0.6
        %v746 = vsub.f32 %v704, 0.6
        %v747 = vsub.f32 %v705, 0.6
        %v748 = vsub.f32 %v706, 0.6
        %v749 = vsub.f32 %v707, 0.6
        %v750 = vsub.f32 %v708, 0.6
        %v751 = vsub.f32 %v709, 0.6
        %v752 = vsub.f32 %v710, 0.6
        %v753 = vsub.f32 %v711, 0.6
        %v754 = vsub.f32 %v712, 0.6
        %v755 = vsub.f32 %v713, 0.6
        %v756 = vsub.f32 %v714, 0.6
        %v757 = vsub.f32 %v715, 0.6
        %v758 = vsub.f32 %v716, 0.6
        %v759 = vsub.f32 %v717, 0.6
        %v760 = vsub.f32 %v718, 0.6
        %v761 = vsub.f32 %v719, 0.6
        %v762 = vsub.f32 %v720, 0.6
        %v763 = vsub.f32 %v721, 0.6
        %v764 = vsub.f32 %v722, 0.6
        %v765 = vsub.f32 %v723, 0.6
        %v766 = vsub.f32 %v724, 0.6
        %v767 = vsub.f32 %v725, 0.6
        %v768 = vsub.f32 %v726, 0.6
        %v769 = vsub.f32 %v727, 0.6
        %v770 = vsub.f32 %v728, 0.6
        %v771 = vsub.f32 %v729, 0.6
        %v772 = vsub.f32 %v730, 0.6
        %v773 = vsub.f32 %v731, 0.6
        %v774 = vsub.f32 %v732, 0.6
        %v775 = vsub.f32 %v733, 0.6
        %v776 = vsub.f32 %v734, 0.6
        %v777 = vsub.f32 %v735, 0.6
        %v778 = vsub.f32 %v736, 0.6
        %v779 = vsub.f32 %v737, 0.6
        %v780 = vsub.f32 %v738, 0.6
        %v781 = vsub.f32 %v739, 0.6
        %v782 = vadd.f32 %v740, 0.1
        %v783 = vadd.f32 %v741, 0.1
        %v784 = vadd.f32 %v742, 0.1
        %v785 = vadd.f32 %v743, 0.1
        %v786 = vadd.f32 %v744, 0.1
        %v787 = vadd.f32 %v745, 0.1
        %v788 = vadd.f32 %v746, 0.1
        %v789 = vadd.f32 %v747, 0.1
        %v790 = vadd.f32 %v748, 0.1
        %v791 = vadd.f32 %v749, 0.1
        %v792 = vadd.f32 %v750, 0.1
        %v793 = vadd.f32 %v751, 0.1
        %v794 = vadd.f32 %v752, 0.1
        %v795 = vadd.f32 %v753, 0.1
        %v796 = vadd.f32 %v754, 0.1
        %v797 = vadd.f32 %v755, 0.1
        %v798 = vadd.f32 %v756, 0.1
        %v799 = vadd.f32 %v757, 0.1
        %v800 = vadd.f32 %v758, 0.1
        %v801 = vadd.f32 %v759, 0.1
        %v802 = vadd.f32 %v760, 0.1
        %v803 = vadd.f32 %v761, 0.1
        %v804 = vadd.f32 %v762, 0.1
        %v805 = vadd.f32 %v763, 0.1
        %v806 = vadd.f32 %v764, 0.1
        %v807 = vadd.f32 %v765, 0.1
        %v808 = vadd.f32 %v766, 0.1
        %v809 = vadd.f32 %v767, 0.1
        %v810 = vadd.f32 %v768, 0.1
        %v811 = vadd.f32 %v769, 0.1
        %v812 = vadd.f32 %v770, 0.1
        %v813 = vadd.f32 %v771, 0.1
        %v814 = vadd.f32 %v772, 0.1
        %v815 = vadd.f32 %v773, 0.1
        %v816 = vadd.f32 %v774, 0.1
        %v817 = vadd.f32 %v775, 0.1
        %v818 = vadd.f32 %v776, 0.1
        %v819 = vadd.f32 %v777, 0.1
        %v820 = vadd.f32 %v778, 0.1
        %v821 = vadd.f32 %v779, 0.1
        %v822 = vadd.f32 %v780, 0.1
        %v823 = vadd.f32 %v781, 0.1
        %v824 = vadd.f32 %v782, %v635
        %v825 = vadd.f32 %v783, %v636
        %v826 = vadd.f32 %v784, %v637
        %v827 = vadd.f32 %v785, %v638
        %v828 = vadd.f32 %v786, %v639
        %v829 = vadd.f32 %v787, %v640
        %v830 = vadd.f32 %v788, %v641
        %v831 = vadd.f32 %v789, %v642
        %v832 = vadd.f32 %v790, %v643
        %v833 = vadd.f32 %v791, %v644
        %v834 = vadd.f32 %v792, %v645
        %v835 = vadd.f32 %v793, %v646
        %v836 = vadd.f32 %v794, %v647
        %v837 = vadd.f32 %v795, %v648
        %v838 = vadd.f32 %v796, %v635
        %v839 = vadd.f32 %v797, %v636
        %v840 = vadd.f32 %v798, %v637
        %v841 = vadd.f32 %v799, %v638
        %v842 = vadd.f32 %v800, %v639
        %v843 = vadd.f32 %v801, %v640
        %v844 = vadd.f32 %v802, %v641
        %v845 = vadd.f32 %v803, %v642
        %v846 = vadd.f32 %v804, %v643
        %v847 = vadd.f32 %v805, %v644
        %v848 = vadd.f32 %v806, %v645
        %v849 = vadd.f32 %v807, %v646
        %v850 = vadd.f32 %v808, %v647
        %v851 = vadd.f32 %v809, %v648
        %v852 = vadd.f32 %v810, %v635
        %v853 = vadd.f32 %v811, %v636
        %v854 = vadd.f32 %v812, %v637
        %v855 = vadd.f32 %v813, %v638
        %v856 = vadd.f32 %v814, %v639
        %v857 = vadd.f32 %v815, %v640
        %v858 = vadd.f32 %v816, %v641
        %v859 = vadd.f32 %v817, %v642
        %v860 = vadd.f32 %v818, %v643
        %v861 = vadd.f32 %v819, %v644
        %v862 = vadd.f32 %v820, %v645
        %v863 = vadd.f32 %v821, %v646
        %v864 = vadd.f32 %v822, %v647
        %v865 = vadd.f32 %v823, %v648
        %v866 = vmul.f32 %v824, 8.0
        %v867 = vmul.f32 %v825, 8.0
        %v868 = vmul.f32 %v826, 8.0
        %v869 = vmul.f32 %v827, 8.0
        %v870 = vmul.f32 %v828, 8.0
        %v871 = vmul.f32 %v829, 8.0
        %v872 = vmul.f32 %v830, 8.0
        %v873 = vmul.f32 %v831, 8.0
        %v874 = vmul.f32 %v832, 8.0
        %v875 = vmul.f32 %v833, 8.0
        %v876 = vmul.f32 %v834, 8.0
        %v877 = vmul.f32 %v835, 8.0
        %v878 = vmul.f32 %v836, 8.0
        %v879 = vmul.f32 %v837, 8.0
        %v880 = vmul.f32 %v838, 8.0
        %v881 = vmul.f32 %v839, 8.0
        %v882 = vmul.f32 %v840, 8.0
        %v883 = vmul.f32 %v841, 8.0
        %v884 = vmul.f32 %v842, 8.0
        %v885 = vmul.f32 %v843, 8.0
        %v886 = vmul.f32 %v844, 8.0
        %v887 = vmul.f32 %v845, 8.0
        %v888 = vmul.f32 %v846, 8.0
        %v889 = vmul.f32 %v847, 8.0
        %v890 = vmul.f32 %v848, 8.0
        %v891 = vmul.f32 %v849, 8.0
        %v892 = vmul.f32 %v850, 8.0
        %v893 = vmul.f32 %v851, 8.0
        %v894 = vmul.f32 %v852, 8.0
        %v895 = vmul.f32 %v853, 8.0
        %v896 = vmul.f32 %v854, 8.0
        %v897 = vmul.f32 %v855, 8.0
        %v898 = vmul.f32 %v856, 8.0
        %v899 = vmul.f32 %v857, 8.0
        %v900 = vmul.f32 %v858, 8.0
        %v901 = vmul.f32 %v859, 8.0
        %v902 = vmul.f32 %v860, 8.0
        %v903 = vmul.f32 %v861, 8.0
        %v904 = vmul.f32 %v862, 8.0
        %v905 = vmul.f32 %v863, 8.0
        %v906 = vmul.f32 %v864, 8.0
        %v907 = vmul.f32 %v865, 8.0
        %v908 = vxor.u32 %v656, 2147483648
        %v909 = vxor.u32 %v657, 2147483648
        %v910 = vxor.u32 %v658, 2147483648
        %v911 = vxor.u32 %v659, 2147483648
        %v912 = vxor.u32 %v660, 2147483648
        %v913 = vxor.u32 %v661, 2147483648
        %v914 = vxor.u32 %v662, 2147483648
        %v915 = vxor.u32 %v663, 2147483648
        %v916 = vxor.u32 %v664, 2147483648
        %v917 = vxor.u32 %v665, 2147483648
        %v918 = vxor.u32 %v666, 2147483648
        %v919 = vxor.u32 %v667, 2147483648
        %v920 = vxor.u32 %v668, 2147483648
        %v921 = vxor.u32 %v669, 2147483648
        %v922 = vxor.u32 %v670, 2147483648
        %v923 = vxor.u32 %v671, 2147483648
        %v924 = vxor.u32 %v672, 2147483648
        %v925 = vxor.u32 %v673, 2147483648
        %v926 = vxor.u32 %v674, 2147483648
        %v927 = vxor.u32 %v675, 2147483648
        %v928 = vxor.u32 %v676, 2147483648
        %v929 = vxor.u32 %v677, 2147483648
        %v930 = vxor.u32 %v678, 2147483648
        %v931 = vxor.u32 %v679, 2147483648
        %v932 = vxor.u32 %v680, 2147483648
        %v933 = vxor.u32 %v681, 2147483648
        %v934 = vxor.u32 %v682, 2147483648
        %v935 = vxor.u32 %v683, 2147483648
        %v936 = vxor.u32 %v684, 2147483648
        %v937 = vxor.u32 %v685, 2147483648
        %v938 = vxor.u32 %v686, 2147483648
        %v939 = vxor.u32 %v687, 2147483648
        %v940 = vxor.u32 %v688, 2147483648
        %v941 = vxor.u32 %v689, 2147483648
        %v942 = vxor.u32 %v690, 2147483648
        %v943 = vxor.u32 %v691, 2147483648
        %v944 = vxor.u32 %v692, 2147483648
        %v945 = vxor.u32 %v693, 2147483648
        %v946 = vxor.u32 %v694, 2147483648
        %v947 = vxor.u32 %v695, 2147483648
        %v948 = vxor.u32 %v696, 2147483648
        %v949 = vxor.u32 %v697, 2147483648
        %v950 = vmul.f32 %v908, 1.442695
        %v951 = vpow.pop %v950
        %v952 = vmul.f32 %v909, 1.442695
        %v953 = vpow.pop %v952
        %v954 = vmul.f32 %v910, 1.442695
        %v955 = vpow.pop %v954
        %v956 = vmul.f32 %v911, 1.442695
        %v957 = vpow.pop %v956
        %v958 = vmul.f32 %v912, 1.442695
        %v959 = vpow.pop %v958
        %v960 = vmul.f32 %v913, 1.442695
        %v961 = vpow.pop %v960
        %v962 = vmul.f32 %v914, 1.442695
        %v963 = vpow.pop %v962
        %v964 = vmul.f32 %v915, 1.442695
        %v965 = vpow.pop %v964
        %v966 = vmul.f32 %v916, 1.442695
        %v967 = vpow.pop %v966
        %v968 = vmul.f32 %v917, 1.442695
        %v969 = vpow.pop %v968
        %v970 = vmul.f32 %v918, 1.442695
        %v971 = vpow.pop %v970
        %v972 = vmul.f32 %v919, 1.442695
        %v973 = vpow.pop %v972
        %v974 = vmul.f32 %v920, 1.442695
        %v975 = vpow.pop %v974
        %v976 = vmul.f32 %v921, 1.442695
        %v977 = vpow.pop %v976
        %v978 = vmul.f32 %v922, 1.442695
        %v979 = vpow.pop %v978
        %v980 = vmul.f32 %v923, 1.442695
        %v981 = vpow.pop %v980
        %v982 = vmul.f32 %v924, 1.442695
        %v983 = vpow.pop %v982
        %v984 = vmul.f32 %v925, 1.442695
        %v985 = vpow.pop %v984
        %v986 = vmul.f32 %v926, 1.442695
        %v987 = vpow.pop %v986
        %v988 = vmul.f32 %v927, 1.442695
        %v989 = vpow.pop %v988
        %v990 = vmul.f32 %v928, 1.442695
        %v991 = vpow.pop %v990
        %v992 = vmul.f32 %v929, 1.442695
        %v993 = vpow.pop %v992
        %v994 = vmul.f32 %v930, 1.442695
        %v995 = vpow.pop %v994
        %v996 = vmul.f32 %v931, 1.442695
        %v997 = vpow.pop %v996
        %v998 = vmul.f32 %v932, 1.442695
        %v999 = vpow.pop %v998
        %v1000 = vmul.f32 %v933, 1.442695
        %v1001 = vpow.pop %v1000
        %v1002 = vmul.f32 %v934, 1.442695
        %v1003 = vpow.pop %v1002
        %v1004 = vmul.f32 %v935, 1.442695
        %v1005 = vpow.pop %v1004
        %v1006 = vmul.f32 %v936, 1.442695
        %v1007 = vpow.pop %v1006
        %v1008 = vmul.f32 %v937, 1.442695
        %v1009 = vpow.pop %v1008
        %v1010 = vmul.f32 %v938, 1.442695
        %v1011 = vpow.pop %v1010
        %v1012 = vmul.f32 %v939, 1.442695
        %v1013 = vpow.pop %v1012
        %v1014 = vmul.f32 %v940, 1.442695
        %v1015 = vpow.pop %v1014
        %v1016 = vmul.f32 %v941, 1.442695
        %v1017 = vpow.pop %v1016
        %v1018 = vmul.f32 %v942, 1.442695
        %v1019 = vpow.pop %v1018
        %v1020 = vmul.f32 %v943, 1.442695
        %v1021 = vpow.pop %v1020
        %v1022 = vmul.f32 %v944, 1.442695
        %v1023 = vpow.pop %v1022
        %v1024 = vmul.f32 %v945, 1.442695
        %v1025 = vpow.pop %v1024
        %v1026 = vmul.f32 %v946, 1.442695
        %v1027 = vpow.pop %v1026
        %v1028 = vmul.f32 %v947, 1.442695
        %v1029 = vpow.pop %v1028
        %v1030 = vmul.f32 %v948, 1.442695
        %v1031 = vpow.pop %v1030
        %v1032 = vmul.f32 %v949, 1.442695
        %v1033 = vpow.pop %v1032
        %v1034 = vadd.f32 %v951, 1.0
        %v1035 = vadd.f32 %v953, 1.0
        %v1036 = vadd.f32 %v955, 1.0
        %v1037 = vadd.f32 %v957, 1.0
        %v1038 = vadd.f32 %v959, 1.0
        %v1039 = vadd.f32 %v961, 1.0
        %v1040 = vadd.f32 %v963, 1.0
        %v1041 = vadd.f32 %v965, 1.0
        %v1042 = vadd.f32 %v967, 1.0
        %v1043 = vadd.f32 %v969, 1.0
        %v1044 = vadd.f32 %v971, 1.0
        %v1045 = vadd.f32 %v973, 1.0
        %v1046 = vadd.f32 %v975, 1.0
        %v1047 = vadd.f32 %v977, 1.0
        %v1048 = vadd.f32 %v979, 1.0
        %v1049 = vadd.f32 %v981, 1.0
        %v1050 = vadd.f32 %v983, 1.0
        %v1051 = vadd.f32 %v985, 1.0
        %v1052 = vadd.f32 %v987, 1.0
        %v1053 = vadd.f32 %v989, 1.0
        %v1054 = vadd.f32 %v991, 1.0
        %v1055 = vadd.f32 %v993, 1.0
        %v1056 = vadd.f32 %v995, 1.0
        %v1057 = vadd.f32 %v997, 1.0
        %v1058 = vadd.f32 %v999, 1.0
        %v1059 = vadd.f32 %v1001, 1.0
        %v1060 = vadd.f32 %v1003, 1.0
        %v1061 = vadd.f32 %v1005, 1.0
        %v1062 = vadd.f32 %v1007, 1.0
        %v1063 = vadd.f32 %v1009, 1.0
        %v1064 = vadd.f32 %v1011, 1.0
        %v1065 = vadd.f32 %v1013, 1.0
        %v1066 = vadd.f32 %v1015, 1.0
        %v1067 = vadd.f32 %v1017, 1.0
        %v1068 = vadd.f32 %v1019, 1.0
        %v1069 = vadd.f32 %v1021, 1.0
        %v1070 = vadd.f32 %v1023, 1.0
        %v1071 = vadd.f32 %v1025, 1.0
        %v1072 = vadd.f32 %v1027, 1.0
        %v1073 = vadd.f32 %v1029, 1.0
        %v1074 = vadd.f32 %v1031, 1.0
        %v1075 = vadd.f32 %v1033, 1.0
        %v1076 = vrcp.pop %v1034
        %v1077 = vmul.f32 1.0, %v1076
        %v1078 = vrcp.pop %v1035
        %v1079 = vmul.f32 1.0, %v1078
        %v1080 = vrcp.pop %v1036
        %v1081 = vmul.f32 1.0, %v1080
        %v1082 = vrcp.pop %v1037
        %v1083 = vmul.f32 1.0, %v1082
        %v1084 = vrcp.pop %v1038
        %v1085 = vmul.f32 1.0, %v1084
        %v1086 = vrcp.pop %v1039
        %v1087 = vmul.f32 1.0, %v1086
        %v1088 = vrcp.pop %v1040
        %v1089 = vmul.f32 1.0, %v1088
        %v1090 = vrcp.pop %v1041
        %v1091 = vmul.f32 1.0, %v1090
        %v1092 = vrcp.pop %v1042
        %v1093 = vmul.f32 1.0, %v1092
        %v1094 = vrcp.pop %v1043
        %v1095 = vmul.f32 1.0, %v1094
        %v1096 = vrcp.pop %v1044
        %v1097 = vmul.f32 1.0, %v1096
        %v1098 = vrcp.pop %v1045
        %v1099 = vmul.f32 1.0, %v1098
        %v1100 = vrcp.pop %v1046
        %v1101 = vmul.f32 1.0, %v1100
        %v1102 = vrcp.pop %v1047
        %v1103 = vmul.f32 1.0, %v1102
        %v1104 = vrcp.pop %v1048
        %v1105 = vmul.f32 1.0, %v1104
        %v1106 = vrcp.pop %v1049
        %v1107 = vmul.f32 1.0, %v1106
        %v1108 = vrcp.pop %v1050
        %v1109 = vmul.f32 1.0, %v1108
        %v1110 = vrcp.pop %v1051
        %v1111 = vmul.f32 1.0, %v1110
        %v1112 = vrcp.pop %v1052
        %v1113 = vmul.f32 1.0, %v1112
        %v1114 = vrcp.pop %v1053
        %v1115 = vmul.f32 1.0, %v1114
        %v1116 = vrcp.pop %v1054
        %v1117 = vmul.f32 1.0, %v1116
        %v1118 = vrcp.pop %v1055
        %v1119 = vmul.f32 1.0, %v1118
        %v1120 = vrcp.pop %v1056
        %v1121 = vmul.f32 1.0, %v1120
        %v1122 = vrcp.pop %v1057
        %v1123 = vmul.f32 1.0, %v1122
        %v1124 = vrcp.pop %v1058
        %v1125 = vmul.f32 1.0, %v1124
        %v1126 = vrcp.pop %v1059
        %v1127 = vmul.f32 1.0, %v1126
        %v1128 = vrcp.pop %v1060
        %v1129 = vmul.f32 1.0, %v1128
        %v1130 = vrcp.pop %v1061
        %v1131 = vmul.f32 1.0, %v1130
        %v1132 = vrcp.pop %v1062
        %v1133 = vmul.f32 1.0, %v1132
        %v1134 = vrcp.pop %v1063
        %v1135 = vmul.f32 1.0, %v1134
        %v1136 = vrcp.pop %v1064
        %v1137 = vmul.f32 1.0, %v1136
        %v1138 = vrcp.pop %v1065
        %v1139 = vmul.f32 1.0, %v1138
        %v1140 = vrcp.pop %v1066
        %v1141 = vmul.f32 1.0, %v1140
        %v1142 = vrcp.pop %v1067
        %v1143 = vmul.f32 1.0, %v1142
        %v1144 = vrcp.pop %v1068
        %v1145 = vmul.f32 1.0, %v1144
        %v1146 = vrcp.pop %v1069
        %v1147 = vmul.f32 1.0, %v1146
        %v1148 = vrcp.pop %v1070
        %v1149 = vmul.f32 1.0, %v1148
        %v1150 = vrcp.pop %v1071
        %v1151 = vmul.f32 1.0, %v1150
        %v1152 = vrcp.pop %v1072
        %v1153 = vmul.f32 1.0, %v1152
        %v1154 = vrcp.pop %v1073
        %v1155 = vmul.f32 1.0, %v1154
        %v1156 = vrcp.pop %v1074
        %v1157 = vmul.f32 1.0, %v1156
        %v1158 = vrcp.pop %v1075
        %v1159 = vmul.f32 1.0, %v1158
        %v1160 = vsel %vm649, 1, 0
        %v1161 = vsel %vm650, 1, 0
        %v1162 = vsel %vm651, 1, 0
        %v1163 = vsel %vm652, 1, 0
        %v1164 = vsel %vm653, 1, 0
        %v1165 = vsel %vm654, 1, 0
        %v1166 = vsel %vm655, 1, 0
        %vm1167 = vcmp.eq.s32.totalorder %v1160, 1
        %vm1168 = vcmp.eq.s32.totalorder %v1161, 1
        %vm1169 = vcmp.eq.s32.totalorder %v1162, 1
        %vm1170 = vcmp.eq.s32.totalorder %v1163, 1
        %vm1171 = vcmp.eq.s32.totalorder %v1164, 1
        %vm1172 = vcmp.eq.s32.totalorder %v1165, 1
        %vm1173 = vcmp.eq.s32.totalorder %v1166, 1
        %v1174 = vsel %vm1167, %v1077, %v866
        %v1175 = vsel %vm1167, %v1079, %v867
        %v1176 = vsel %vm1168, %v1081, %v868
        %v1177 = vsel %vm1168, %v1083, %v869
        %v1178 = vsel %vm1169, %v1085, %v870
        %v1179 = vsel %vm1169, %v1087, %v871
        %v1180 = vsel %vm1170, %v1089, %v872
        %v1181 = vsel %vm1170, %v1091, %v873
        %v1182 = vsel %vm1171, %v1093, %v874
        %v1183 = vsel %vm1171, %v1095, %v875
        %v1184 = vsel %vm1172, %v1097, %v876
        %v1185 = vsel %vm1172, %v1099, %v877
        %v1186 = vsel %vm1173, %v1101, %v878
        %v1187 = vsel %vm1173, %v1103, %v879
        %v1188 = vsel %vm1167, %v1105, %v880
        %v1189 = vsel %vm1167, %v1107, %v881
        %v1190 = vsel %vm1168, %v1109, %v882
        %v1191 = vsel %vm1168, %v1111, %v883
        %v1192 = vsel %vm1169, %v1113, %v884
        %v1193 = vsel %vm1169, %v1115, %v885
        %v1194 = vsel %vm1170, %v1117, %v886
        %v1195 = vsel %vm1170, %v1119, %v887
        %v1196 = vsel %vm1171, %v1121, %v888
        %v1197 = vsel %vm1171, %v1123, %v889
        %v1198 = vsel %vm1172, %v1125, %v890
        %v1199 = vsel %vm1172, %v1127, %v891
        %v1200 = vsel %vm1173, %v1129, %v892
        %v1201 = vsel %vm1173, %v1131, %v893
        %v1202 = vsel %vm1167, %v1133, %v894
        %v1203 = vsel %vm1167, %v1135, %v895
        %v1204 = vsel %vm1168, %v1137, %v896
        %v1205 = vsel %vm1168, %v1139, %v897
        %v1206 = vsel %vm1169, %v1141, %v898
        %v1207 = vsel %vm1169, %v1143, %v899
        %v1208 = vsel %vm1170, %v1145, %v900
        %v1209 = vsel %vm1170, %v1147, %v901
        %v1210 = vsel %vm1171, %v1149, %v902
        %v1211 = vsel %vm1171, %v1151, %v903
        %v1212 = vsel %vm1172, %v1153, %v904
        %v1213 = vsel %vm1172, %v1155, %v905
        %v1214 = vsel %vm1173, %v1157, %v906
        %v1215 = vsel %vm1173, %v1159, %v907
        %1216 = vst [vmem:[%s309] sm:$0xff] %v1174
        %1217 = vst [vmem:[%s309 + $0x8] sm:$0xff] %v1175
        %1218 = vst [vmem:[%s309 + $0x10] sm:$0xff] %v1176
        %1219 = vst [vmem:[%s309 + $0x18] sm:$0xff] %v1177
        %1220 = vst [vmem:[%s309 + $0x20] sm:$0xff] %v1178
        %1221 = vst [vmem:[%s309 + $0x28] sm:$0xff] %v1179
        %1222 = vst [vmem:[%s309 + $0x30] sm:$0xff] %v1180
        %1223 = vst [vmem:[%s309 + $0x38] sm:$0xff] %v1181
        %1224 = vst [vmem:[%s309 + $0x40] sm:$0xff] %v1182
        %1225 = vst [vmem:[%s309 + $0x48] sm:$0xff] %v1183
        %1226 = vst [vmem:[%s309 + $0x50] sm:$0xff] %v1184
        %1227 = vst [vmem:[%s309 + $0x58] sm:$0xff] %v1185
        %1228 = vst [vmem:[%s309 + $0x60] sm:$0x7] %v1186
        %1229 = vst [vmem:[%s309 + $0x68] sm:$0x7] %v1187
        %1230 = vst [vmem:[%s309 + $0x70] sm:$0xff] %v1188
        %1231 = vst [vmem:[%s309 + $0x78] sm:$0xff] %v1189
        %1232 = vst [vmem:[%s309 + $0x80] sm:$0xff] %v1190
        %1233 = vst [vmem:[%s309 + $0x88] sm:$0xff] %v1191
        %1234 = vst [vmem:[%s309 + $0x90] sm:$0xff] %v1192
        %1235 = vst [vmem:[%s309 + $0x98] sm:$0xff] %v1193
        %1236 = vst [vmem:[%s309 + $0xa0] sm:$0xff] %v1194
        %1237 = vst [vmem:[%s309 + $0xa8] sm:$0xff] %v1195
        %1238 = vst [vmem:[%s309 + $0xb0] sm:$0xff] %v1196
        %1239 = vst [vmem:[%s309 + $0xb8] sm:$0xff] %v1197
        %1240 = vst [vmem:[%s309 + $0xc0] sm:$0xff] %v1198
        %1241 = vst [vmem:[%s309 + $0xc8] sm:$0xff] %v1199
        %1242 = vst [vmem:[%s309 + $0xd0] sm:$0x7] %v1200
        %1243 = vst [vmem:[%s309 + $0xd8] sm:$0x7] %v1201
        %1244 = vst [vmem:[%s309 + $0xe0] sm:$0xff] %v1202
        %1245 = vst [vmem:[%s309 + $0xe8] sm:$0xff] %v1203
        %1246 = vst [vmem:[%s309 + $0xf0] sm:$0xff] %v1204
        %1247 = vst [vmem:[%s309 + $0xf8] sm:$0xff] %v1205
        %1248 = vst [vmem:[%s309 + $0x100] sm:$0xff] %v1206
        %1249 = vst [vmem:[%s309 + $0x108] sm:$0xff] %v1207
        %1250 = vst [vmem:[%s309 + $0x110] sm:$0xff] %v1208
        %1251 = vst [vmem:[%s309 + $0x118] sm:$0xff] %v1209
        %1252 = vst [vmem:[%s309 + $0x120] sm:$0xff] %v1210
        %1253 = vst [vmem:[%s309 + $0x128] sm:$0xff] %v1211
        %1254 = vst [vmem:[%s309 + $0x130] sm:$0xff] %v1212
        %1255 = vst [vmem:[%s309 + $0x138] sm:$0xff] %v1213
        %1256 = vst [vmem:[%s309 + $0x140] sm:$0x7] %v1214
        %1257 = vst [vmem:[%s309 + $0x148] sm:$0x7] %v1215
        %s1258 = smul.u32 2, %s22
        %p1259 = scmp.lt.s32.totalorder %s21, 1
        %s1260 = scalar_select %p1259, %s21, 1
        %p1261 = scmp.lt.s32.totalorder %s1258, 1
        %s1262 = scalar_select %p1261, %s1258, 1
        %s1263 = smul.addr %s1260, 30
        %s1264 = sadd.s32 %s1262, %s1263
        %s1265 = smul.addr %s1264, 8
        %s1266 = scalar_lea.vmem %s3, %s1265
        %s1267 = smul.u32 2, %s22
        %p1268 = scmp.lt.s32.totalorder %s21, 1
        %s1269 = scalar_select %p1268, %s21, 1
        %p1270 = scmp.lt.s32.totalorder %s1267, 1
        %s1271 = scalar_select %p1270, %s1267, 1
        %s1272 = smul.addr %s1269, 42
        %s1273 = sadd.s32 %s1271, %s1272
        %s1274 = smul.addr %s1273, 8
        %s1275 = scalar_lea.vmem %s4, %s1274
        // Predicated region
        $region37: #{yolo_seg_keypoint.1} parent=31 // pred_check
          %p1276 = pneg %p126
        $region38: #{yolo_seg_keypoint.1} parent=31 // pred_check_branch
          %1278 = sbr.rel (%p1276) target = $region40
        $region39: #{yolo_seg_keypoint.1} parent=31 // pred_region
          %s1279 = smul.u32 2, %s22
        $region40: #{yolo_seg_keypoint.1} parent=31 // pred_fallthru
          _
        // Predicated region
        $region41: #{yolo_seg_keypoint.1} parent=31 // pred_check
          %p1280 = pneg %p154
        $region42: #{yolo_seg_keypoint.1} parent=31 // pred_check_branch
          %1282 = sbr.rel (%p1280) target = $region44
        $region43: #{yolo_seg_keypoint.1} parent=31 // pred_region
          %s1283 = smul.u32 2, %s22
        $region44: #{yolo_seg_keypoint.1} parent=31 // pred_fallthru
          _
      $region32: #{yolo_seg_keypoint.1} parent=5 // pred_fallthru
        _
      %p1284 = scmp.le.s32.totalorder 2, %s12
      // Predicated region
      $region45: #{yolo_seg_keypoint.1} parent=5 // pred_check
        %p1285 = pneg %p1284
      $region46: #{yolo_seg_keypoint.1} parent=5 // pred_check_branch
        %1287 = sbr.rel (%p1285) target = $region48
      $region47: #{yolo_seg_keypoint.1} parent=5 // pred_region
        %s1288 = ssub.s32 %s12, 2
        // Predicated region
        $region49: #{yolo_seg_keypoint.1} parent=47 // pred_check
          %p1289 = pneg %p132
        $region50: #{yolo_seg_keypoint.1} parent=47 // pred_check_branch
          %1291 = sbr.rel (%p1289) target = $region52
        $region51: #{yolo_seg_keypoint.1} parent=47 // pred_region
          %s1292 = smul.u32 2, %s24
          %p1293 = scmp.lt.s32.totalorder %s23, 1
          %s1294 = scalar_select %p1293, %s23, 1
          %p1295 = scmp.lt.s32.totalorder %s1292, 1
          %s1296 = scalar_select %p1295, %s1292, 1
          %s1297 = smul.addr %s1294, 30
          %s1298 = sadd.s32 %s1296, %s1297
          %s1299 = smul.addr %s1298, 8
          %s1300 = scalar_lea.vmem %s3, %s1299
        $region52: #{yolo_seg_keypoint.1} parent=47 // pred_fallthru
          _
        // Predicated region
        $region53: #{yolo_seg_keypoint.1} parent=47 // pred_check
          %p1301 = pneg %p160
        $region54: #{yolo_seg_keypoint.1} parent=47 // pred_check_branch
          %1303 = sbr.rel (%p1301) target = $region56
        $region55: #{yolo_seg_keypoint.1} parent=47 // pred_region
          %s1304 = smul.u32 2, %s24
          %p1305 = scmp.lt.s32.totalorder %s23, 1
          %s1306 = scalar_select %p1305, %s23, 1
          %p1307 = scmp.lt.s32.totalorder %s1304, 1
          %s1308 = scalar_select %p1307, %s1304, 1
          %s1309 = smul.addr %s1306, 42
          %s1310 = sadd.s32 %s1308, %s1309
          %s1311 = smul.addr %s1310, 8
          %s1312 = scalar_lea.vmem %s4, %s1311
        $region56: #{yolo_seg_keypoint.1} parent=47 // pred_fallthru
          _
      $region48: #{yolo_seg_keypoint.1} parent=5 // pred_fallthru
        _
    $region6: #{yolo_seg_keypoint.1} parent=1 // loop_footer
      %s16 = sadd.s32 1, %s12
    $region7: #{yolo_seg_keypoint.1} parent=1 // loop_footer_branch
      %11 = sbr.rel target = $region3
    $region8: #{yolo_seg_keypoint.1} parent=1 // loop_exit
      _
    %1313 = vsyncpa [#allocation3], 1
    %s1314 = scalar_lea.sflag [#allocation3], 1
    %1315 = vsyncpa %s1314, 1

</llo_original>
